<compile_context>
chip_gen: v7x
topology: tpu7x:2x2x1
jax: 0.10.0
libtpu: 0.0.40
codegen_flags: <defaults>
</compile_context>

<pallas_src>
import jax
import jax.numpy as jnp
from jax.experimental import pallas as pl
from jax.experimental.pallas import tpu as pltpu


# -----------------------------------------------------------------------------
# Pallas kernel: fused im2col + matmul + bias, lane-dense output
# -----------------------------------------------------------------------------
def _make_conv_kernel(offsets, l_out):
    """offsets: static lane offsets, one per (kh, kw) tap; l_out: flat output length."""

    def kernel(x_ref, w_ref, b_ref, o_ref):
        # x_ref: [nb, Cp, Lin]    padded, flattened input block
        # w_ref: [KK, Cout, Cp]   per-tap weight slices (resident every step)
        # b_ref: [Cout, 1]        bias (lane broadcast)
        # o_ref: [nb, Cout, Lout] lane-dense output block
        nb = x_ref.shape[0]
        cout = o_ref.shape[1]
        for i in range(nb):                        # static unroll (nb is 1 or 2)
            acc = jnp.zeros((cout, l_out), dtype=jnp.float32)
            for k, off in enumerate(offsets):      # static unroll over the 9 taps
                xs = x_ref[i, :, off:off + l_out]                  # [Cp, Lout]
                wk = w_ref[k]                                      # [Cout, Cp]
                acc = acc + jnp.dot(wk, xs,
                                    preferred_element_type=jnp.float32)
            o_ref[i] = (acc + b_ref[...]).astype(o_ref.dtype)

    return kernel


def _grid_steps(n_batch):
    """v7x has 2 TensorCores/chip -> 2 parallel grid steps; otherwise 1 step
    (per-step overhead dominates at this problem size)."""
    try:
        kind = jax.devices()[0].device_kind.lower()
    except Exception:
        kind = ""
    if ("v7" in kind or "7x" in kind) and n_batch % 2 == 0:
        return 2
    return 1


def _pallas_conv_flat(x_flat, w_taps, bias2d, *, offsets, l_out):
    """x_flat: [N, Cp, Lin] f32; w_taps: [KK, Cout, Cp] f32; bias2d: [Cout, 1] f32
    -> [N, Cout, Lout] f32 (lane-dense flat spatial axis)."""
    n, cp, lin = x_flat.shape
    kk, cout, _ = w_taps.shape
    steps = _grid_steps(n)
    nb = n // steps

    kernel = _make_conv_kernel(tuple(int(o) for o in offsets), int(l_out))

    cost = pl.CostEstimate(
        flops=2 * n * cout * l_out * cp * kk,
        transcendentals=0,
        bytes_accessed=4 * (x_flat.size + w_taps.size + bias2d.size
                            + n * cout * l_out),
    )

    return pl.pallas_call(
        kernel,
        out_shape=jax.ShapeDtypeStruct((n, cout, l_out), jnp.float32),
        grid_spec=pltpu.PrefetchScalarGridSpec(
            num_scalar_prefetch=0,
            grid=(steps,),
            in_specs=[
                pl.BlockSpec((nb, cp, lin), lambda i: (i, 0, 0)),
                pl.BlockSpec((kk, cout, cp), lambda i: (0, 0, 0)),
                pl.BlockSpec((cout, 1), lambda i: (0, 0)),
            ],
            out_specs=pl.BlockSpec((nb, cout, l_out), lambda i: (i, 0, 0)),
        ),
        compiler_params=pltpu.CompilerParams(
            dimension_semantics=("parallel",),
        ),
        cost_estimate=cost,
    )(x_flat, w_taps, bias2d)


# -----------------------------------------------------------------------------
# The wrapped module (Conv2d 4->8, 3x3, stride 1, padding=1) on the Pallas kernel
# -----------------------------------------------------------------------------
def conv2d_module_forward(x_nchw, weight, bias):
    """x: [N,C,H,W]; weight: [Cout,Cin,KH,KW]; bias: [Cout] -> [N,Cout,H,W]."""
    n, c, h, w = x_nchw.shape
    cout, cin, kh, kw = weight.shape
    assert cin == c

    ph, pw = kh // 2, kw // 2                       # 'same' padding (1 for 3x3)
    wp = w + 2 * pw
    # bottom guard rows so every flat tap window (offset + Lout) stays in bounds
    pb = (kh - 1 - ph) + (1 if kw > 1 else 0)
    hp = h + ph + pb
    cp = -(-c // 8) * 8                             # channels padded to sublane multiple

    x_p = jnp.pad(x_nchw.astype(jnp.float32),
                  ((0, 0), (0, cp - c), (ph, pb), (pw, pw)))     # [N, Cp, Hp, Wp]
    x_flat = x_p.reshape(n, cp, hp * wp)                          # [N, Cp, Lin]

    # per-tap weight slices: w_taps[r*KW + s, co, ci] = weight[co, ci, r, s]
    w_taps = jnp.transpose(weight.astype(jnp.float32), (2, 3, 0, 1))  # [KH,KW,Cout,Cin]
    w_taps = w_taps.reshape(kh * kw, cout, cin)
    w_taps = jnp.pad(w_taps, ((0, 0), (0, 0), (0, cp - cin)))          # [KK,Cout,Cp]
    bias2d = bias.astype(jnp.float32).reshape(cout, 1)

    offsets = [r * wp + s for r in range(kh) for s in range(kw)]
    l_out = h * wp

    out_flat = _pallas_conv_flat(x_flat, w_taps, bias2d,
                                 offsets=offsets, l_out=l_out)    # [N, Cout, H*Wp]
    # lane-dense flat layout back to NCHW: reshape + column crop, no transpose.
    return out_flat.reshape(n, cout, h, wp)[:, :, :, :w]


# -----------------------------------------------------------------------------
# DistModule equivalent
# -----------------------------------------------------------------------------
def broadcast_params(params):
    # dist.broadcast(p, 0) from rank 0: identity on a single device.
    # TODO(synk): multi-device parameter broadcast would use pltpu.make_async_remote_copy
    # over a device mesh; not implemented for this single-device port.
    return params


class DistModuleJAX:
    """Mirrors DistModule: broadcast params at init, forward delegates to module."""

    def __init__(self, module_fn, params):
        self.module_fn = module_fn
        self.params = broadcast_params(params)

    def __call__(self, *inputs, **kwargs):
        return self.module_fn(*inputs, **self.params, **kwargs)


# -----------------------------------------------------------------------------
# main
# -----------------------------------------------------------------------------
if __name__ == "__main__":
    key = jax.random.PRNGKey(0)
    k_x, k_w, k_b = jax.random.split(key, 3)

    N, Cin, H, W = 2, 4, 16, 16
    Cout, KH, KW = 8, 3, 3

    x = jax.random.normal(k_x, (N, Cin, H, W), dtype=jnp.float32)
    weight = jax.random.normal(k_w, (Cout, Cin, KH, KW), dtype=jnp.float32) * 0.1
    bias = jax.random.normal(k_b, (Cout,), dtype=jnp.float32) * 0.1

    dist_module = DistModuleJAX(conv2d_module_forward,
                                {"weight": weight, "bias": bias})

    out = dist_module(x)
    out = jax.block_until_ready(out)

    # lightweight correctness check vs XLA conv reference
    ref = jax.lax.conv_general_dilated(
        x, weight, window_strides=(1, 1), padding="SAME",
        dimension_numbers=("NCHW", "OIHW", "NCHW"),
    ) + bias.reshape(1, Cout, 1, 1)
    assert out.shape == (N, Cout, H, W)
    assert jnp.allclose(out, ref, atol=1e-4, rtol=1e-4)

    print("KERNEL_OK")
</pallas_src>

<mosaic_0001>
module attributes {stable_mosaic.version = 11 : i64} {
  func.func @kernel(%arg0: i32, %arg1: memref<2x8x342xf32, #tpu.memory_space<vmem>>, %arg2: memref<9x8x8xf32, #tpu.memory_space<vmem>>, %arg3: memref<8x1xf32, #tpu.memory_space<vmem>>, %arg4: memref<2x8x288xf32, #tpu.memory_space<vmem>>) attributes {dimension_semantics = [#tpu.dimension_semantics<parallel>], iteration_bounds = array<i64: 1>, scalar_prefetch = 0 : i64, scratch_operands = 0 : i64, tpu.core_type = #tpu.core_type<tc>, window_params = [{transform_indices = @transform_0, window_bounds = array<i64: 2, 8, 342>}, {pipeline_mode = #tpu.pipeline_mode<synchronous>, transform_indices = @transform_1, window_bounds = array<i64: 9, 8, 8>}, {pipeline_mode = #tpu.pipeline_mode<synchronous>, transform_indices = @transform_2, window_bounds = array<i64: 8, 1>}, {transform_indices = @transform_3, window_bounds = array<i64: 2, 8, 288>}]} {
    %cst = arith.constant 0.000000e+00 : f32
    %0 = vector.broadcast %cst : f32 to vector<8x288xf32>
    %c0 = arith.constant 0 : index
    %c0_0 = arith.constant 0 : index
    %c0_1 = arith.constant 0 : index
    %1 = vector.load %arg1[%c0, %c0_0, %c0_1] : memref<2x8x342xf32, #tpu.memory_space<vmem>>, vector<1x8x288xf32>
    %2 = vector.shape_cast %1 : vector<1x8x288xf32> to vector<8x288xf32>
    %c0_2 = arith.constant 0 : index
    %c0_3 = arith.constant 0 : index
    %c0_4 = arith.constant 0 : index
    %3 = vector.load %arg2[%c0_2, %c0_3, %c0_4] : memref<9x8x8xf32, #tpu.memory_space<vmem>>, vector<1x8x8xf32>
    %4 = vector.shape_cast %3 : vector<1x8x8xf32> to vector<8x8xf32>
    %cst_5 = arith.constant dense<0.000000e+00> : vector<8x288xf32>
    %5 = tpu.matmul %4, %2, %cst_5 {dimension_numbers = #tpu.dot_dimension_numbers<[1], [0], [0], [1], [0, 0, 1, 1], [], []>} : vector<8x8xf32>, vector<8x288xf32>, vector<8x288xf32> -> vector<8x288xf32>
    %6 = arith.addf %0, %5 : vector<8x288xf32>
    %c0_6 = arith.constant 0 : index
    %c0_7 = arith.constant 0 : index
    %c1 = arith.constant 1 : index
    %7 = vector.load %arg1[%c0_6, %c0_7, %c1] : memref<2x8x342xf32, #tpu.memory_space<vmem>>, vector<1x8x288xf32>
    %8 = vector.shape_cast %7 : vector<1x8x288xf32> to vector<8x288xf32>
    %c1_8 = arith.constant 1 : index
    %c0_9 = arith.constant 0 : index
    %c0_10 = arith.constant 0 : index
    %9 = vector.load %arg2[%c1_8, %c0_9, %c0_10] : memref<9x8x8xf32, #tpu.memory_space<vmem>>, vector<1x8x8xf32>
    %10 = vector.shape_cast %9 : vector<1x8x8xf32> to vector<8x8xf32>
    %cst_11 = arith.constant dense<0.000000e+00> : vector<8x288xf32>
    %11 = tpu.matmul %10, %8, %cst_11 {dimension_numbers = #tpu.dot_dimension_numbers<[1], [0], [0], [1], [0, 0, 1, 1], [], []>} : vector<8x8xf32>, vector<8x288xf32>, vector<8x288xf32> -> vector<8x288xf32>
    %12 = arith.addf %6, %11 : vector<8x288xf32>
    %c0_12 = arith.constant 0 : index
    %c0_13 = arith.constant 0 : index
    %c2 = arith.constant 2 : index
    %13 = vector.load %arg1[%c0_12, %c0_13, %c2] : memref<2x8x342xf32, #tpu.memory_space<vmem>>, vector<1x8x288xf32>
    %14 = vector.shape_cast %13 : vector<1x8x288xf32> to vector<8x288xf32>
    %c2_14 = arith.constant 2 : index
    %c0_15 = arith.constant 0 : index
    %c0_16 = arith.constant 0 : index
    %15 = vector.load %arg2[%c2_14, %c0_15, %c0_16] : memref<9x8x8xf32, #tpu.memory_space<vmem>>, vector<1x8x8xf32>
    %16 = vector.shape_cast %15 : vector<1x8x8xf32> to vector<8x8xf32>
    %cst_17 = arith.constant dense<0.000000e+00> : vector<8x288xf32>
    %17 = tpu.matmul %16, %14, %cst_17 {dimension_numbers = #tpu.dot_dimension_numbers<[1], [0], [0], [1], [0, 0, 1, 1], [], []>} : vector<8x8xf32>, vector<8x288xf32>, vector<8x288xf32> -> vector<8x288xf32>
    %18 = arith.addf %12, %17 : vector<8x288xf32>
    %c0_18 = arith.constant 0 : index
    %c0_19 = arith.constant 0 : index
    %c18 = arith.constant 18 : index
    %19 = vector.load %arg1[%c0_18, %c0_19, %c18] : memref<2x8x342xf32, #tpu.memory_space<vmem>>, vector<1x8x288xf32>
    %20 = vector.shape_cast %19 : vector<1x8x288xf32> to vector<8x288xf32>
    %c3 = arith.constant 3 : index
    %c0_20 = arith.constant 0 : index
    %c0_21 = arith.constant 0 : index
    %21 = vector.load %arg2[%c3, %c0_20, %c0_21] : memref<9x8x8xf32, #tpu.memory_space<vmem>>, vector<1x8x8xf32>
    %22 = vector.shape_cast %21 : vector<1x8x8xf32> to vector<8x8xf32>
    %cst_22 = arith.constant dense<0.000000e+00> : vector<8x288xf32>
    %23 = tpu.matmul %22, %20, %cst_22 {dimension_numbers = #tpu.dot_dimension_numbers<[1], [0], [0], [1], [0, 0, 1, 1], [], []>} : vector<8x8xf32>, vector<8x288xf32>, vector<8x288xf32> -> vector<8x288xf32>
    %24 = arith.addf %18, %23 : vector<8x288xf32>
    %c0_23 = arith.constant 0 : index
    %c0_24 = arith.constant 0 : index
    %c19 = arith.constant 19 : index
    %25 = vector.load %arg1[%c0_23, %c0_24, %c19] : memref<2x8x342xf32, #tpu.memory_space<vmem>>, vector<1x8x288xf32>
    %26 = vector.shape_cast %25 : vector<1x8x288xf32> to vector<8x288xf32>
    %c4 = arith.constant 4 : index
    %c0_25 = arith.constant 0 : index
    %c0_26 = arith.constant 0 : index
    %27 = vector.load %arg2[%c4, %c0_25, %c0_26] : memref<9x8x8xf32, #tpu.memory_space<vmem>>, vector<1x8x8xf32>
    %28 = vector.shape_cast %27 : vector<1x8x8xf32> to vector<8x8xf32>
    %cst_27 = arith.constant dense<0.000000e+00> : vector<8x288xf32>
    %29 = tpu.matmul %28, %26, %cst_27 {dimension_numbers = #tpu.dot_dimension_numbers<[1], [0], [0], [1], [0, 0, 1, 1], [], []>} : vector<8x8xf32>, vector<8x288xf32>, vector<8x288xf32> -> vector<8x288xf32>
    %30 = arith.addf %24, %29 : vector<8x288xf32>
    %c0_28 = arith.constant 0 : index
    %c0_29 = arith.constant 0 : index
    %c20 = arith.constant 20 : index
    %31 = vector.load %arg1[%c0_28, %c0_29, %c20] : memref<2x8x342xf32, #tpu.memory_space<vmem>>, vector<1x8x288xf32>
    %32 = vector.shape_cast %31 : vector<1x8x288xf32> to vector<8x288xf32>
    %c5 = arith.constant 5 : index
    %c0_30 = arith.constant 0 : index
    %c0_31 = arith.constant 0 : index
    %33 = vector.load %arg2[%c5, %c0_30, %c0_31] : memref<9x8x8xf32, #tpu.memory_space<vmem>>, vector<1x8x8xf32>
    %34 = vector.shape_cast %33 : vector<1x8x8xf32> to vector<8x8xf32>
    %cst_32 = arith.constant dense<0.000000e+00> : vector<8x288xf32>
    %35 = tpu.matmul %34, %32, %cst_32 {dimension_numbers = #tpu.dot_dimension_numbers<[1], [0], [0], [1], [0, 0, 1, 1], [], []>} : vector<8x8xf32>, vector<8x288xf32>, vector<8x288xf32> -> vector<8x288xf32>
    %36 = arith.addf %30, %35 : vector<8x288xf32>
    %c0_33 = arith.constant 0 : index
    %c0_34 = arith.constant 0 : index
    %c36 = arith.constant 36 : index
    %37 = vector.load %arg1[%c0_33, %c0_34, %c36] : memref<2x8x342xf32, #tpu.memory_space<vmem>>, vector<1x8x288xf32>
    %38 = vector.shape_cast %37 : vector<1x8x288xf32> to vector<8x288xf32>
    %c6 = arith.constant 6 : index
    %c0_35 = arith.constant 0 : index
    %c0_36 = arith.constant 0 : index
    %39 = vector.load %arg2[%c6, %c0_35, %c0_36] : memref<9x8x8xf32, #tpu.memory_space<vmem>>, vector<1x8x8xf32>
    %40 = vector.shape_cast %39 : vector<1x8x8xf32> to vector<8x8xf32>
    %cst_37 = arith.constant dense<0.000000e+00> : vector<8x288xf32>
    %41 = tpu.matmul %40, %38, %cst_37 {dimension_numbers = #tpu.dot_dimension_numbers<[1], [0], [0], [1], [0, 0, 1, 1], [], []>} : vector<8x8xf32>, vector<8x288xf32>, vector<8x288xf32> -> vector<8x288xf32>
    %42 = arith.addf %36, %41 : vector<8x288xf32>
    %c0_38 = arith.constant 0 : index
    %c0_39 = arith.constant 0 : index
    %c37 = arith.constant 37 : index
    %43 = vector.load %arg1[%c0_38, %c0_39, %c37] : memref<2x8x342xf32, #tpu.memory_space<vmem>>, vector<1x8x288xf32>
    %44 = vector.shape_cast %43 : vector<1x8x288xf32> to vector<8x288xf32>
    %c7 = arith.constant 7 : index
    %c0_40 = arith.constant 0 : index
    %c0_41 = arith.constant 0 : index
    %45 = vector.load %arg2[%c7, %c0_40, %c0_41] : memref<9x8x8xf32, #tpu.memory_space<vmem>>, vector<1x8x8xf32>
    %46 = vector.shape_cast %45 : vector<1x8x8xf32> to vector<8x8xf32>
    %cst_42 = arith.constant dense<0.000000e+00> : vector<8x288xf32>
    %47 = tpu.matmul %46, %44, %cst_42 {dimension_numbers = #tpu.dot_dimension_numbers<[1], [0], [0], [1], [0, 0, 1, 1], [], []>} : vector<8x8xf32>, vector<8x288xf32>, vector<8x288xf32> -> vector<8x288xf32>
    %48 = arith.addf %42, %47 : vector<8x288xf32>
    %c0_43 = arith.constant 0 : index
    %c0_44 = arith.constant 0 : index
    %c38 = arith.constant 38 : index
    %49 = vector.load %arg1[%c0_43, %c0_44, %c38] : memref<2x8x342xf32, #tpu.memory_space<vmem>>, vector<1x8x288xf32>
    %50 = vector.shape_cast %49 : vector<1x8x288xf32> to vector<8x288xf32>
    %c8 = arith.constant 8 : index
    %c0_45 = arith.constant 0 : index
    %c0_46 = arith.constant 0 : index
    %51 = vector.load %arg2[%c8, %c0_45, %c0_46] : memref<9x8x8xf32, #tpu.memory_space<vmem>>, vector<1x8x8xf32>
    %52 = vector.shape_cast %51 : vector<1x8x8xf32> to vector<8x8xf32>
    %cst_47 = arith.constant dense<0.000000e+00> : vector<8x288xf32>
    %53 = tpu.matmul %52, %50, %cst_47 {dimension_numbers = #tpu.dot_dimension_numbers<[1], [0], [0], [1], [0, 0, 1, 1], [], []>} : vector<8x8xf32>, vector<8x288xf32>, vector<8x288xf32> -> vector<8x288xf32>
    %54 = arith.addf %48, %53 : vector<8x288xf32>
    %c0_48 = arith.constant 0 : index
    %c0_49 = arith.constant 0 : index
    %55 = vector.load %arg3[%c0_48, %c0_49] : memref<8x1xf32, #tpu.memory_space<vmem>>, vector<8x1xf32>
    %56 = vector.broadcast %55 : vector<8x1xf32> to vector<8x288xf32>
    %57 = arith.addf %54, %56 : vector<8x288xf32>
    %c0_50 = arith.constant 0 : index
    %c0_51 = arith.constant 0 : index
    %c0_52 = arith.constant 0 : index
    %58 = vector.load %arg4[%c0_50, %c0_51, %c0_52] : memref<2x8x288xf32, #tpu.memory_space<vmem>>, vector<1x8x288xf32>
    %59 = vector.shape_cast %58 : vector<1x8x288xf32> to vector<8x288xf32>
    %60 = vector.shape_cast %57 : vector<8x288xf32> to vector<1x8x288xf32>
    tpu.vector_store %arg4[%c0_50, %c0_51, %c0_52], %60 {strides = array<i32>} : memref<2x8x288xf32, #tpu.memory_space<vmem>>, vector<1x8x288xf32>,
    %cst_53 = arith.constant 0.000000e+00 : f32
    %61 = vector.broadcast %cst_53 : f32 to vector<8x288xf32>
    %c1_54 = arith.constant 1 : index
    %c0_55 = arith.constant 0 : index
    %c0_56 = arith.constant 0 : index
    %62 = vector.load %arg1[%c1_54, %c0_55, %c0_56] : memref<2x8x342xf32, #tpu.memory_space<vmem>>, vector<1x8x288xf32>
    %63 = vector.shape_cast %62 : vector<1x8x288xf32> to vector<8x288xf32>
    %c0_57 = arith.constant 0 : index
    %c0_58 = arith.constant 0 : index
    %c0_59 = arith.constant 0 : index
    %64 = vector.load %arg2[%c0_57, %c0_58, %c0_59] : memref<9x8x8xf32, #tpu.memory_space<vmem>>, vector<1x8x8xf32>
    %65 = vector.shape_cast %64 : vector<1x8x8xf32> to vector<8x8xf32>
    %cst_60 = arith.constant dense<0.000000e+00> : vector<8x288xf32>
    %66 = tpu.matmul %65, %63, %cst_60 {dimension_numbers = #tpu.dot_dimension_numbers<[1], [0], [0], [1], [0, 0, 1, 1], [], []>} : vector<8x8xf32>, vector<8x288xf32>, vector<8x288xf32> -> vector<8x288xf32>
    %67 = arith.addf %61, %66 : vector<8x288xf32>
    %c1_61 = arith.constant 1 : index
    %c0_62 = arith.constant 0 : index
    %c1_63 = arith.constant 1 : index
    %68 = vector.load %arg1[%c1_61, %c0_62, %c1_63] : memref<2x8x342xf32, #tpu.memory_space<vmem>>, vector<1x8x288xf32>
    %69 = vector.shape_cast %68 : vector<1x8x288xf32> to vector<8x288xf32>
    %c1_64 = arith.constant 1 : index
    %c0_65 = arith.constant 0 : index
    %c0_66 = arith.constant 0 : index
    %70 = vector.load %arg2[%c1_64, %c0_65, %c0_66] : memref<9x8x8xf32, #tpu.memory_space<vmem>>, vector<1x8x8xf32>
    %71 = vector.shape_cast %70 : vector<1x8x8xf32> to vector<8x8xf32>
    %cst_67 = arith.constant dense<0.000000e+00> : vector<8x288xf32>
    %72 = tpu.matmul %71, %69, %cst_67 {dimension_numbers = #tpu.dot_dimension_numbers<[1], [0], [0], [1], [0, 0, 1, 1], [], []>} : vector<8x8xf32>, vector<8x288xf32>, vector<8x288xf32> -> vector<8x288xf32>
    %73 = arith.addf %67, %72 : vector<8x288xf32>
    %c1_68 = arith.constant 1 : index
    %c0_69 = arith.constant 0 : index
    %c2_70 = arith.constant 2 : index
    %74 = vector.load %arg1[%c1_68, %c0_69, %c2_70] : memref<2x8x342xf32, #tpu.memory_space<vmem>>, vector<1x8x288xf32>
    %75 = vector.shape_cast %74 : vector<1x8x288xf32> to vector<8x288xf32>
    %c2_71 = arith.constant 2 : index
    %c0_72 = arith.constant 0 : index
    %c0_73 = arith.constant 0 : index
    %76 = vector.load %arg2[%c2_71, %c0_72, %c0_73] : memref<9x8x8xf32, #tpu.memory_space<vmem>>, vector<1x8x8xf32>
    %77 = vector.shape_cast %76 : vector<1x8x8xf32> to vector<8x8xf32>
    %cst_74 = arith.constant dense<0.000000e+00> : vector<8x288xf32>
    %78 = tpu.matmul %77, %75, %cst_74 {dimension_numbers = #tpu.dot_dimension_numbers<[1], [0], [0], [1], [0, 0, 1, 1], [], []>} : vector<8x8xf32>, vector<8x288xf32>, vector<8x288xf32> -> vector<8x288xf32>
    %79 = arith.addf %73, %78 : vector<8x288xf32>
    %c1_75 = arith.constant 1 : index
    %c0_76 = arith.constant 0 : index
    %c18_77 = arith.constant 18 : index
    %80 = vector.load %arg1[%c1_75, %c0_76, %c18_77] : memref<2x8x342xf32, #tpu.memory_space<vmem>>, vector<1x8x288xf32>
    %81 = vector.shape_cast %80 : vector<1x8x288xf32> to vector<8x288xf32>
    %c3_78 = arith.constant 3 : index
    %c0_79 = arith.constant 0 : index
    %c0_80 = arith.constant 0 : index
    %82 = vector.load %arg2[%c3_78, %c0_79, %c0_80] : memref<9x8x8xf32, #tpu.memory_space<vmem>>, vector<1x8x8xf32>
    %83 = vector.shape_cast %82 : vector<1x8x8xf32> to vector<8x8xf32>
    %cst_81 = arith.constant dense<0.000000e+00> : vector<8x288xf32>
    %84 = tpu.matmul %83, %81, %cst_81 {dimension_numbers = #tpu.dot_dimension_numbers<[1], [0], [0], [1], [0, 0, 1, 1], [], []>} : vector<8x8xf32>, vector<8x288xf32>, vector<8x288xf32> -> vector<8x288xf32>
    %85 = arith.addf %79, %84 : vector<8x288xf32>
    %c1_82 = arith.constant 1 : index
    %c0_83 = arith.constant 0 : index
    %c19_84 = arith.constant 19 : index
    %86 = vector.load %arg1[%c1_82, %c0_83, %c19_84] : memref<2x8x342xf32, #tpu.memory_space<vmem>>, vector<1x8x288xf32>
    %87 = vector.shape_cast %86 : vector<1x8x288xf32> to vector<8x288xf32>
    %c4_85 = arith.constant 4 : index
    %c0_86 = arith.constant 0 : index
    %c0_87 = arith.constant 0 : index
    %88 = vector.load %arg2[%c4_85, %c0_86, %c0_87] : memref<9x8x8xf32, #tpu.memory_space<vmem>>, vector<1x8x8xf32>
    %89 = vector.shape_cast %88 : vector<1x8x8xf32> to vector<8x8xf32>
    %cst_88 = arith.constant dense<0.000000e+00> : vector<8x288xf32>
    %90 = tpu.matmul %89, %87, %cst_88 {dimension_numbers = #tpu.dot_dimension_numbers<[1], [0], [0], [1], [0, 0, 1, 1], [], []>} : vector<8x8xf32>, vector<8x288xf32>, vector<8x288xf32> -> vector<8x288xf32>
    %91 = arith.addf %85, %90 : vector<8x288xf32>
    %c1_89 = arith.constant 1 : index
    %c0_90 = arith.constant 0 : index
    %c20_91 = arith.constant 20 : index
    %92 = vector.load %arg1[%c1_89, %c0_90, %c20_91] : memref<2x8x342xf32, #tpu.memory_space<vmem>>, vector<1x8x288xf32>
    %93 = vector.shape_cast %92 : vector<1x8x288xf32> to vector<8x288xf32>
    %c5_92 = arith.constant 5 : index
    %c0_93 = arith.constant 0 : index
    %c0_94 = arith.constant 0 : index
    %94 = vector.load %arg2[%c5_92, %c0_93, %c0_94] : memref<9x8x8xf32, #tpu.memory_space<vmem>>, vector<1x8x8xf32>
    %95 = vector.shape_cast %94 : vector<1x8x8xf32> to vector<8x8xf32>
    %cst_95 = arith.constant dense<0.000000e+00> : vector<8x288xf32>
    %96 = tpu.matmul %95, %93, %cst_95 {dimension_numbers = #tpu.dot_dimension_numbers<[1], [0], [0], [1], [0, 0, 1, 1], [], []>} : vector<8x8xf32>, vector<8x288xf32>, vector<8x288xf32> -> vector<8x288xf32>
    %97 = arith.addf %91, %96 : vector<8x288xf32>
    %c1_96 = arith.constant 1 : index
    %c0_97 = arith.constant 0 : index
    %c36_98 = arith.constant 36 : index
    %98 = vector.load %arg1[%c1_96, %c0_97, %c36_98] : memref<2x8x342xf32, #tpu.memory_space<vmem>>, vector<1x8x288xf32>
    %99 = vector.shape_cast %98 : vector<1x8x288xf32> to vector<8x288xf32>
    %c6_99 = arith.constant 6 : index
    %c0_100 = arith.constant 0 : index
    %c0_101 = arith.constant 0 : index
    %100 = vector.load %arg2[%c6_99, %c0_100, %c0_101] : memref<9x8x8xf32, #tpu.memory_space<vmem>>, vector<1x8x8xf32>
    %101 = vector.shape_cast %100 : vector<1x8x8xf32> to vector<8x8xf32>
    %cst_102 = arith.constant dense<0.000000e+00> : vector<8x288xf32>
    %102 = tpu.matmul %101, %99, %cst_102 {dimension_numbers = #tpu.dot_dimension_numbers<[1], [0], [0], [1], [0, 0, 1, 1], [], []>} : vector<8x8xf32>, vector<8x288xf32>, vector<8x288xf32> -> vector<8x288xf32>
    %103 = arith.addf %97, %102 : vector<8x288xf32>
    %c1_103 = arith.constant 1 : index
    %c0_104 = arith.constant 0 : index
    %c37_105 = arith.constant 37 : index
    %104 = vector.load %arg1[%c1_103, %c0_104, %c37_105] : memref<2x8x342xf32, #tpu.memory_space<vmem>>, vector<1x8x288xf32>
    %105 = vector.shape_cast %104 : vector<1x8x288xf32> to vector<8x288xf32>
    %c7_106 = arith.constant 7 : index
    %c0_107 = arith.constant 0 : index
    %c0_108 = arith.constant 0 : index
    %106 = vector.load %arg2[%c7_106, %c0_107, %c0_108] : memref<9x8x8xf32, #tpu.memory_space<vmem>>, vector<1x8x8xf32>
    %107 = vector.shape_cast %106 : vector<1x8x8xf32> to vector<8x8xf32>
    %cst_109 = arith.constant dense<0.000000e+00> : vector<8x288xf32>
    %108 = tpu.matmul %107, %105, %cst_109 {dimension_numbers = #tpu.dot_dimension_numbers<[1], [0], [0], [1], [0, 0, 1, 1], [], []>} : vector<8x8xf32>, vector<8x288xf32>, vector<8x288xf32> -> vector<8x288xf32>
    %109 = arith.addf %103, %108 : vector<8x288xf32>
    %c1_110 = arith.constant 1 : index
    %c0_111 = arith.constant 0 : index
    %c38_112 = arith.constant 38 : index
    %110 = vector.load %arg1[%c1_110, %c0_111, %c38_112] : memref<2x8x342xf32, #tpu.memory_space<vmem>>, vector<1x8x288xf32>
    %111 = vector.shape_cast %110 : vector<1x8x288xf32> to vector<8x288xf32>
    %c8_113 = arith.constant 8 : index
    %c0_114 = arith.constant 0 : index
    %c0_115 = arith.constant 0 : index
    %112 = vector.load %arg2[%c8_113, %c0_114, %c0_115] : memref<9x8x8xf32, #tpu.memory_space<vmem>>, vector<1x8x8xf32>
    %113 = vector.shape_cast %112 : vector<1x8x8xf32> to vector<8x8xf32>
    %cst_116 = arith.constant dense<0.000000e+00> : vector<8x288xf32>
    %114 = tpu.matmul %113, %111, %cst_116 {dimension_numbers = #tpu.dot_dimension_numbers<[1], [0], [0], [1], [0, 0, 1, 1], [], []>} : vector<8x8xf32>, vector<8x288xf32>, vector<8x288xf32> -> vector<8x288xf32>
    %115 = arith.addf %109, %114 : vector<8x288xf32>
    %c0_117 = arith.constant 0 : index
    %c0_118 = arith.constant 0 : index
    %116 = vector.load %arg3[%c0_117, %c0_118] : memref<8x1xf32, #tpu.memory_space<vmem>>, vector<8x1xf32>
    %117 = vector.broadcast %116 : vector<8x1xf32> to vector<8x288xf32>
    %118 = arith.addf %115, %117 : vector<8x288xf32>
    %c1_119 = arith.constant 1 : index
    %c0_120 = arith.constant 0 : index
    %c0_121 = arith.constant 0 : index
    %119 = vector.load %arg4[%c1_119, %c0_120, %c0_121] : memref<2x8x288xf32, #tpu.memory_space<vmem>>, vector<1x8x288xf32>
    %120 = vector.shape_cast %119 : vector<1x8x288xf32> to vector<8x288xf32>
    %121 = vector.shape_cast %118 : vector<8x288xf32> to vector<1x8x288xf32>
    tpu.vector_store %arg4[%c1_119, %c0_120, %c0_121], %121 {strides = array<i32>} : memref<2x8x288xf32, #tpu.memory_space<vmem>>, vector<1x8x288xf32>,
    return
  }
  func.func @transform_0(%arg0: i32) -> (i32, i32, i32) {
    %c0_i32 = arith.constant 0 : i32
    %c0_i32_0 = arith.constant 0 : i32
    %c0_i32_1 = arith.constant 0 : i32
    return %arg0, %c0_i32, %c0_i32_0 : i32, i32, i32
  }
  func.func @transform_1(%arg0: i32) -> (i32, i32, i32) {
    %c0_i32 = arith.constant 0 : i32
    %c0_i32_0 = arith.constant 0 : i32
    %c0_i32_1 = arith.constant 0 : i32
    %c0_i32_2 = arith.constant 0 : i32
    return %c0_i32, %c0_i32_0, %c0_i32_1 : i32, i32, i32
  }
  func.func @transform_2(%arg0: i32) -> (i32, i32) {
    %c0_i32 = arith.constant 0 : i32
    %c0_i32_0 = arith.constant 0 : i32
    %c0_i32_1 = arith.constant 0 : i32
    return %c0_i32, %c0_i32_0 : i32, i32
  }
  func.func @transform_3(%arg0: i32) -> (i32, i32, i32) {
    %c0_i32 = arith.constant 0 : i32
    %c0_i32_0 = arith.constant 0 : i32
    %c0_i32_1 = arith.constant 0 : i32
    return %arg0, %c0_i32, %c0_i32_0 : i32, i32, i32
  }
}

</mosaic_0001>

<llo_original>
// kernel: tpu_custom_call.1
$region0: #{tpu_custom_call.1}
  #allocation0 [shape = 'u32[]', space=smem, size = 0x4, offset = 0x4, fixed_abs, tag = 'smem constant byte address 0x4 - core index']
  #allocation1 [shape = 'u32[144,128]{1,0:T(1,128)}', space=vmem, size = 0x12000, scoped, tag = 'internal scratch']
  %s0 = inlined_call_operand.vmem [shape: f32[2,8,342], index: 0, kind: input, shape index: {}]
  %s1 = inlined_call_operand.vmem [shape: f32[9,8,8], index: 1, kind: input, shape index: {}]
  %s2 = inlined_call_operand.vmem [shape: f32[8,1], index: 2, kind: input, shape index: {}]
  %s3 = inlined_call_operand.hbm [shape: f32[2,8,288], index: 3, kind: output, shape index: {}]
  %s4 = sld [smem:[#allocation0]]
  $region22: #{tpu_custom_call.1} parent=0
    _
  %s6 = ssub.s32 1, %s4
  %s7 = scalar_select 0, %s6, %s4
  $region1: #{tpu_custom_call.1} parent=0
    #allocation2 [shape = 'u8[24576]{0}', space=vmem, size = 0x6000, scoped, tag = 'output window, operand 0, single buffered']
    #allocation3 [shape = 's32[1]{0}', space=sflag, size = 0x4, scoped, tag = 'scoped memory for tpu_custom_call.1']
    %8 = vsyncpa [#allocation3], 0
    // Predicated region
    $region2: #{tpu_custom_call.1} parent=1 // pred_check
      _
    $region3: #{tpu_custom_call.1} parent=1 // pred_check_branch
      %10 = sbr.rel (0) target = $region5
    $region4: #{tpu_custom_call.1} parent=1 // pred_region
      _
    $region5: #{tpu_custom_call.1} parent=1 // pred_fallthru
      _
    // Predicated region
    $region6: #{tpu_custom_call.1} parent=1 // pred_check
      _
    $region7: #{tpu_custom_call.1} parent=1 // pred_check_branch
      %12 = sbr.rel (0) target = $region9
    $region8: #{tpu_custom_call.1} parent=1 // pred_region
      _
    $region9: #{tpu_custom_call.1} parent=1 // pred_fallthru
      _
    // Predicated region
    $region10: #{tpu_custom_call.1} parent=1 // pred_check
      _
    $region11: #{tpu_custom_call.1} parent=1 // pred_check_branch
      %14 = sbr.rel (0) target = $region13
    $region12: #{tpu_custom_call.1} parent=1 // pred_region
      _
    $region13: #{tpu_custom_call.1} parent=1 // pred_fallthru
      _
    %v15 = vld [vmem:[%s0] sm:$0xff]
    %v16 = vld [vmem:[%s0 + $0x8] sm:$0xff]
    %v17 = vld [vmem:[%s0 + $0x10] sm:$0xff]
    %v18 = vld [vmem:[%s1] sm:$0xff]
    %s19 = scalar_lea.vmem %s1, 8
    %v20 = vld [vmem:[%s19] sm:$0xff]
    %24 = vrot.lane.b32.xlu0 %v15, 127
    %v25 = vpop.permute.xlu0 %24
    %26 = vrot.lane.b32.xlu0 %v16, 127
    %v27 = vpop.permute.xlu0 %26
    %28 = vrot.lane.b32.xlu0 %v17, 127
    %v29 = vpop.permute.xlu0 %28
    %vm30 = vcmask 1039360
    %v31 = vsel %vm30, %v25, %v27
    %v32 = vsel %vm30, %v27, %v29
    %vm36 = vcmask 64512
    %v38 = vsel %vm36, %v20, 0
    %40 = vmatprep.subr.mxu0 %v32
    %41 = vmatpush1.msra.mxu0 %v31
    %42 = vmatprep.subr.mxu0 0.0
    %43 = vmatpush1.msra.mxu0 0.0
    %44 = vmatprep.subr.mxu0 0.0
    %45 = vmatpush1.msra.mxu0 0.0
    %46 = vmatprep.subr.mxu0 0.0
    %47 = vmatpush1.msra.mxu0 0.0
    %48 = vmatprep.subr.mxu0 0.0
    %49 = vmatpush1.msra.mxu0 0.0
    %50 = vmatprep.subr.mxu0 0.0
    %51 = vmatpush1.msra.mxu0 0.0
    %52 = vmatprep.subr.mxu0 0.0
    %53 = vmatpush1.msra.mxu0 0.0
    %54 = vmatprep.subr.mxu0 0.0
    %55 = vmatpush1.msra.mxu0 0.0
    %56 = vmatprep.subr.mxu0 0.0
    %57 = vmatpush1.msra.mxu0 0.0
    %58 = vmatprep.subr.mxu0 0.0
    %59 = vmatpush1.msra.mxu0 0.0
    %60 = vmatprep.subr.mxu0 0.0
    %61 = vmatpush1.msra.mxu0 0.0
    %62 = vmatprep.subr.mxu0 0.0
    %63 = vmatpush1.msra.mxu0 0.0
    %64 = vmatprep.subr.mxu0 0.0
    %65 = vmatpush1.msra.mxu0 0.0
    %66 = vmatprep.subr.mxu0 0.0
    %67 = vmatpush1.msra.mxu0 0.0
    %68 = vmatprep.subr.mxu0 0.0
    %69 = vmatpush1.msra.mxu0 0.0
    %70 = vmatprep.subr.mxu0 0.0
    %71 = vmatpush1.msra.mxu0 0.0
    %72 = vmatprep.subr.mxu0 0.0
    %73 = vmatpush1.msra.mxu0 0.0
    %74 = vmatprep.subr.mxu0 0.0
    %75 = vmatpush1.msra.mxu0 0.0
    %76 = vmatprep.subr.mxu0 0.0
    %77 = vmatpush1.msra.mxu0 0.0
    %78 = vmatprep.subr.mxu0 0.0
    %79 = vmatpush1.msra.mxu0 0.0
    %80 = vmatprep.subr.mxu0 0.0
    %81 = vmatpush1.msra.mxu0 0.0
    %82 = vmatprep.subr.mxu0 0.0
    %83 = vmatpush1.msra.mxu0 0.0
    %84 = vmatprep.subr.mxu0 0.0
    %85 = vmatpush1.msra.mxu0 0.0
    %86 = vmatprep.subr.mxu0 0.0
    %87 = vmatpush1.msra.mxu0 0.0
    %88 = vmatprep.subr.mxu0 0.0
    %89 = vmatpush1.msra.mxu0 0.0
    %90 = vmatprep.subr.mxu0 0.0
    %91 = vmatpush1.msra.mxu0 0.0
    %92 = vmatprep.subr.mxu0 0.0
    %93 = vmatpush1.msra.mxu0 0.0
    %94 = vmatprep.subr.mxu0 0.0
    %95 = vmatpush1.msra.mxu0 0.0
    %96 = vmatprep.subr.mxu0 0.0
    %97 = vmatpush1.msra.mxu0 0.0
    %98 = vmatprep.subr.mxu0 0.0
    %99 = vmatpush1.msra.mxu0 0.0
    %100 = vmatprep.subr.mxu0 0.0
    %101 = vmatpush1.msra.mxu0 0.0
    %102 = vmatprep.subr.mxu0 0.0
    %103 = vmatpush1.msra.mxu0 0.0
    %104 = vmatprep.mubr.f32.mxu0 0.0
    %105 = vmatmul.mubr.f32.gmra.mrb[0].mxu0 %v38
    %v106 = vpop.f32.mrb[0].mxu0
    %v107 = vadd.f32 0.0, %v106
    %v108 = vpop.f32.mrb[0].mxu0
    %v109 = vadd.f32 0.0, %v108
    %110 = vdwg.mxu0
    %111 = vmatprep.subr.mxu0 0.0
    %112 = vmatpush1.msra.mxu0 %v29
    %113 = vmatprep.subr.mxu0 0.0
    %114 = vmatpush1.msra.mxu0 0.0
    %115 = vmatprep.subr.mxu0 0.0
    %116 = vmatpush1.msra.mxu0 0.0
    %117 = vmatprep.subr.mxu0 0.0
    %118 = vmatpush1.msra.mxu0 0.0
    %119 = vmatprep.subr.mxu0 0.0
    %120 = vmatpush1.msra.mxu0 0.0
    %121 = vmatprep.subr.mxu0 0.0
    %122 = vmatpush1.msra.mxu0 0.0
    %123 = vmatprep.subr.mxu0 0.0
    %124 = vmatpush1.msra.mxu0 0.0
    %125 = vmatprep.subr.mxu0 0.0
    %126 = vmatpush1.msra.mxu0 0.0
    %127 = vmatprep.subr.mxu0 0.0
    %128 = vmatpush1.msra.mxu0 0.0
    %129 = vmatprep.subr.mxu0 0.0
    %130 = vmatpush1.msra.mxu0 0.0
    %131 = vmatprep.subr.mxu0 0.0
    %132 = vmatpush1.msra.mxu0 0.0
    %133 = vmatprep.subr.mxu0 0.0
    %134 = vmatpush1.msra.mxu0 0.0
    %135 = vmatprep.subr.mxu0 0.0
    %136 = vmatpush1.msra.mxu0 0.0
    %137 = vmatprep.subr.mxu0 0.0
    %138 = vmatpush1.msra.mxu0 0.0
    %139 = vmatprep.subr.mxu0 0.0
    %140 = vmatpush1.msra.mxu0 0.0
    %141 = vmatprep.subr.mxu0 0.0
    %142 = vmatpush1.msra.mxu0 0.0
    %143 = vmatprep.subr.mxu0 0.0
    %144 = vmatpush1.msra.mxu0 0.0
    %145 = vmatprep.subr.mxu0 0.0
    %146 = vmatpush1.msra.mxu0 0.0
    %147 = vmatprep.subr.mxu0 0.0
    %148 = vmatpush1.msra.mxu0 0.0
    %149 = vmatprep.subr.mxu0 0.0
    %150 = vmatpush1.msra.mxu0 0.0
    %151 = vmatprep.subr.mxu0 0.0
    %152 = vmatpush1.msra.mxu0 0.0
    %153 = vmatprep.subr.mxu0 0.0
    %154 = vmatpush1.msra.mxu0 0.0
    %155 = vmatprep.subr.mxu0 0.0
    %156 = vmatpush1.msra.mxu0 0.0
    %157 = vmatprep.subr.mxu0 0.0
    %158 = vmatpush1.msra.mxu0 0.0
    %159 = vmatprep.subr.mxu0 0.0
    %160 = vmatpush1.msra.mxu0 0.0
    %161 = vmatprep.subr.mxu0 0.0
    %162 = vmatpush1.msra.mxu0 0.0
    %163 = vmatprep.subr.mxu0 0.0
    %164 = vmatpush1.msra.mxu0 0.0
    %165 = vmatprep.subr.mxu0 0.0
    %166 = vmatpush1.msra.mxu0 0.0
    %167 = vmatprep.subr.mxu0 0.0
    %168 = vmatpush1.msra.mxu0 0.0
    %169 = vmatprep.subr.mxu0 0.0
    %170 = vmatpush1.msra.mxu0 0.0
    %171 = vmatprep.subr.mxu0 0.0
    %172 = vmatpush1.msra.mxu0 0.0
    %173 = vmatprep.subr.mxu0 0.0
    %174 = vmatpush1.msra.mxu0 0.0
    %175 = vmatprep.mubr.f32.mxu0 0.0
    %176 = vmatmul.mubr.f32.gmra.mrb[0].mxu0 %v38
    %v177 = vpop.f32.mrb[0].mxu0
    %v178 = vadd.f32 0.0, %v177
    %v179 = vpop.f32.mrb[0].mxu0
    %180 = vdwg.mxu0
    %v182 = vsel %vm36, %v18, 0
    %184 = vmatprep.subr.mxu0 %v16
    %185 = vmatpush1.msra.mxu0 %v15
    %186 = vmatprep.subr.mxu0 0.0
    %187 = vmatpush1.msra.mxu0 0.0
    %188 = vmatprep.subr.mxu0 0.0
    %189 = vmatpush1.msra.mxu0 0.0
    %190 = vmatprep.subr.mxu0 0.0
    %191 = vmatpush1.msra.mxu0 0.0
    %192 = vmatprep.subr.mxu0 0.0
    %193 = vmatpush1.msra.mxu0 0.0
    %194 = vmatprep.subr.mxu0 0.0
    %195 = vmatpush1.msra.mxu0 0.0
    %196 = vmatprep.subr.mxu0 0.0
    %197 = vmatpush1.msra.mxu0 0.0
    %198 = vmatprep.subr.mxu0 0.0
    %199 = vmatpush1.msra.mxu0 0.0
    %200 = vmatprep.subr.mxu0 0.0
    %201 = vmatpush1.msra.mxu0 0.0
    %202 = vmatprep.subr.mxu0 0.0
    %203 = vmatpush1.msra.mxu0 0.0
    %204 = vmatprep.subr.mxu0 0.0
    %205 = vmatpush1.msra.mxu0 0.0
    %206 = vmatprep.subr.mxu0 0.0
    %207 = vmatpush1.msra.mxu0 0.0
    %208 = vmatprep.subr.mxu0 0.0
    %209 = vmatpush1.msra.mxu0 0.0
    %210 = vmatprep.subr.mxu0 0.0
    %211 = vmatpush1.msra.mxu0 0.0
    %212 = vmatprep.subr.mxu0 0.0
    %213 = vmatpush1.msra.mxu0 0.0
    %214 = vmatprep.subr.mxu0 0.0
    %215 = vmatpush1.msra.mxu0 0.0
    %216 = vmatprep.subr.mxu0 0.0
    %217 = vmatpush1.msra.mxu0 0.0
    %218 = vmatprep.subr.mxu0 0.0
    %219 = vmatpush1.msra.mxu0 0.0
    %220 = vmatprep.subr.mxu0 0.0
    %221 = vmatpush1.msra.mxu0 0.0
    %222 = vmatprep.subr.mxu0 0.0
    %223 = vmatpush1.msra.mxu0 0.0
    %224 = vmatprep.subr.mxu0 0.0
    %225 = vmatpush1.msra.mxu0 0.0
    %226 = vmatprep.subr.mxu0 0.0
    %227 = vmatpush1.msra.mxu0 0.0
    %228 = vmatprep.subr.mxu0 0.0
    %229 = vmatpush1.msra.mxu0 0.0
    %230 = vmatprep.subr.mxu0 0.0
    %231 = vmatpush1.msra.mxu0 0.0
    %232 = vmatprep.subr.mxu0 0.0
    %233 = vmatpush1.msra.mxu0 0.0
    %234 = vmatprep.subr.mxu0 0.0
    %235 = vmatpush1.msra.mxu0 0.0
    %236 = vmatprep.subr.mxu0 0.0
    %237 = vmatpush1.msra.mxu0 0.0
    %238 = vmatprep.subr.mxu0 0.0
    %239 = vmatpush1.msra.mxu0 0.0
    %240 = vmatprep.subr.mxu0 0.0
    %241 = vmatpush1.msra.mxu0 0.0
    %242 = vmatprep.subr.mxu0 0.0
    %243 = vmatpush1.msra.mxu0 0.0
    %244 = vmatprep.subr.mxu0 0.0
    %245 = vmatpush1.msra.mxu0 0.0
    %246 = vmatprep.subr.mxu0 0.0
    %247 = vmatpush1.msra.mxu0 0.0
    %248 = vmatprep.mubr.f32.mxu0 0.0
    %249 = vmatmul.mubr.f32.gmra.mrb[0].mxu0 %v182
    %v250 = vpop.f32.mrb[0].mxu0
    %v251 = vadd.f32 %v107, %v250
    %v252 = vpop.f32.mrb[0].mxu0
    %v253 = vadd.f32 %v109, %v252
    %254 = vdwg.mxu0
    %255 = vmatprep.subr.mxu0 0.0
    %256 = vmatpush1.msra.mxu0 %v17
    %257 = vmatprep.subr.mxu0 0.0
    %258 = vmatpush1.msra.mxu0 0.0
    %259 = vmatprep.subr.mxu0 0.0
    %260 = vmatpush1.msra.mxu0 0.0
    %261 = vmatprep.subr.mxu0 0.0
    %262 = vmatpush1.msra.mxu0 0.0
    %263 = vmatprep.subr.mxu0 0.0
    %264 = vmatpush1.msra.mxu0 0.0
    %265 = vmatprep.subr.mxu0 0.0
    %266 = vmatpush1.msra.mxu0 0.0
    %267 = vmatprep.subr.mxu0 0.0
    %268 = vmatpush1.msra.mxu0 0.0
    %269 = vmatprep.subr.mxu0 0.0
    %270 = vmatpush1.msra.mxu0 0.0
    %271 = vmatprep.subr.mxu0 0.0
    %272 = vmatpush1.msra.mxu0 0.0
    %273 = vmatprep.subr.mxu0 0.0
    %274 = vmatpush1.msra.mxu0 0.0
    %275 = vmatprep.subr.mxu0 0.0
    %276 = vmatpush1.msra.mxu0 0.0
    %277 = vmatprep.subr.mxu0 0.0
    %278 = vmatpush1.msra.mxu0 0.0
    %279 = vmatprep.subr.mxu0 0.0
    %280 = vmatpush1.msra.mxu0 0.0
    %281 = vmatprep.subr.mxu0 0.0
    %282 = vmatpush1.msra.mxu0 0.0
    %283 = vmatprep.subr.mxu0 0.0
    %284 = vmatpush1.msra.mxu0 0.0
    %285 = vmatprep.subr.mxu0 0.0
    %286 = vmatpush1.msra.mxu0 0.0
    %287 = vmatprep.subr.mxu0 0.0
    %288 = vmatpush1.msra.mxu0 0.0
    %289 = vmatprep.subr.mxu0 0.0
    %290 = vmatpush1.msra.mxu0 0.0
    %291 = vmatprep.subr.mxu0 0.0
    %292 = vmatpush1.msra.mxu0 0.0
    %293 = vmatprep.subr.mxu0 0.0
    %294 = vmatpush1.msra.mxu0 0.0
    %295 = vmatprep.subr.mxu0 0.0
    %296 = vmatpush1.msra.mxu0 0.0
    %297 = vmatprep.subr.mxu0 0.0
    %298 = vmatpush1.msra.mxu0 0.0
    %299 = vmatprep.subr.mxu0 0.0
    %300 = vmatpush1.msra.mxu0 0.0
    %301 = vmatprep.subr.mxu0 0.0
    %302 = vmatpush1.msra.mxu0 0.0
    %303 = vmatprep.subr.mxu0 0.0
    %304 = vmatpush1.msra.mxu0 0.0
    %305 = vmatprep.subr.mxu0 0.0
    %306 = vmatpush1.msra.mxu0 0.0
    %307 = vmatprep.subr.mxu0 0.0
    %308 = vmatpush1.msra.mxu0 0.0
    %309 = vmatprep.subr.mxu0 0.0
    %310 = vmatpush1.msra.mxu0 0.0
    %311 = vmatprep.subr.mxu0 0.0
    %312 = vmatpush1.msra.mxu0 0.0
    %313 = vmatprep.subr.mxu0 0.0
    %314 = vmatpush1.msra.mxu0 0.0
    %315 = vmatprep.subr.mxu0 0.0
    %316 = vmatpush1.msra.mxu0 0.0
    %317 = vmatprep.subr.mxu0 0.0
    %318 = vmatpush1.msra.mxu0 0.0
    %319 = vmatprep.mubr.f32.mxu0 0.0
    %320 = vmatmul.mubr.f32.gmra.mrb[0].mxu0 %v182
    %v321 = vpop.f32.mrb[0].mxu0
    %v322 = vadd.f32 %v178, %v321
    %v323 = vpop.f32.mrb[0].mxu0
    %324 = vdwg.mxu0
    %s325 = scalar_lea.vmem %s1, 16
    %v326 = vld [vmem:[%s325] sm:$0xff]
    %327 = vrot.lane.b32.xlu0 %v15, 126
    %v328 = vpop.permute.xlu0 %327
    %329 = vrot.lane.b32.xlu0 %v16, 126
    %v330 = vpop.permute.xlu0 %329
    %331 = vrot.lane.b32.xlu0 %v17, 126
    %v332 = vpop.permute.xlu0 %331
    %vm333 = vcmask 1031168
    %v334 = vsel %vm333, %v328, %v330
    %v335 = vsel %vm333, %v330, %v332
    %v340 = vsel %vm36, %v326, 0
    %342 = vmatprep.subr.mxu0 %v335
    %343 = vmatpush1.msra.mxu0 %v334
    %344 = vmatprep.subr.mxu0 0.0
    %345 = vmatpush1.msra.mxu0 0.0
    %346 = vmatprep.subr.mxu0 0.0
    %347 = vmatpush1.msra.mxu0 0.0
    %348 = vmatprep.subr.mxu0 0.0
    %349 = vmatpush1.msra.mxu0 0.0
    %350 = vmatprep.subr.mxu0 0.0
    %351 = vmatpush1.msra.mxu0 0.0
    %352 = vmatprep.subr.mxu0 0.0
    %353 = vmatpush1.msra.mxu0 0.0
    %354 = vmatprep.subr.mxu0 0.0
    %355 = vmatpush1.msra.mxu0 0.0
    %356 = vmatprep.subr.mxu0 0.0
    %357 = vmatpush1.msra.mxu0 0.0
    %358 = vmatprep.subr.mxu0 0.0
    %359 = vmatpush1.msra.mxu0 0.0
    %360 = vmatprep.subr.mxu0 0.0
    %361 = vmatpush1.msra.mxu0 0.0
    %362 = vmatprep.subr.mxu0 0.0
    %363 = vmatpush1.msra.mxu0 0.0
    %364 = vmatprep.subr.mxu0 0.0
    %365 = vmatpush1.msra.mxu0 0.0
    %366 = vmatprep.subr.mxu0 0.0
    %367 = vmatpush1.msra.mxu0 0.0
    %368 = vmatprep.subr.mxu0 0.0
    %369 = vmatpush1.msra.mxu0 0.0
    %370 = vmatprep.subr.mxu0 0.0
    %371 = vmatpush1.msra.mxu0 0.0
    %372 = vmatprep.subr.mxu0 0.0
    %373 = vmatpush1.msra.mxu0 0.0
    %374 = vmatprep.subr.mxu0 0.0
    %375 = vmatpush1.msra.mxu0 0.0
    %376 = vmatprep.subr.mxu0 0.0
    %377 = vmatpush1.msra.mxu0 0.0
    %378 = vmatprep.subr.mxu0 0.0
    %379 = vmatpush1.msra.mxu0 0.0
    %380 = vmatprep.subr.mxu0 0.0
    %381 = vmatpush1.msra.mxu0 0.0
    %382 = vmatprep.subr.mxu0 0.0
    %383 = vmatpush1.msra.mxu0 0.0
    %384 = vmatprep.subr.mxu0 0.0
    %385 = vmatpush1.msra.mxu0 0.0
    %386 = vmatprep.subr.mxu0 0.0
    %387 = vmatpush1.msra.mxu0 0.0
    %388 = vmatprep.subr.mxu0 0.0
    %389 = vmatpush1.msra.mxu0 0.0
    %390 = vmatprep.subr.mxu0 0.0
    %391 = vmatpush1.msra.mxu0 0.0
    %392 = vmatprep.subr.mxu0 0.0
    %393 = vmatpush1.msra.mxu0 0.0
    %394 = vmatprep.subr.mxu0 0.0
    %395 = vmatpush1.msra.mxu0 0.0
    %396 = vmatprep.subr.mxu0 0.0
    %397 = vmatpush1.msra.mxu0 0.0
    %398 = vmatprep.subr.mxu0 0.0
    %399 = vmatpush1.msra.mxu0 0.0
    %400 = vmatprep.subr.mxu0 0.0
    %401 = vmatpush1.msra.mxu0 0.0
    %402 = vmatprep.subr.mxu0 0.0
    %403 = vmatpush1.msra.mxu0 0.0
    %404 = vmatprep.subr.mxu0 0.0
    %405 = vmatpush1.msra.mxu0 0.0
    %406 = vmatprep.mubr.f32.mxu0 0.0
    %407 = vmatmul.mubr.f32.gmra.mrb[0].mxu0 %v340
    %v408 = vpop.f32.mrb[0].mxu0
    %v409 = vadd.f32 0.0, %v408
    %v410 = vpop.f32.mrb[0].mxu0
    %v411 = vadd.f32 0.0, %v410
    %412 = vdwg.mxu0
    %413 = vmatprep.subr.mxu0 0.0
    %414 = vmatpush1.msra.mxu0 %v332
    %415 = vmatprep.subr.mxu0 0.0
    %416 = vmatpush1.msra.mxu0 0.0
    %417 = vmatprep.subr.mxu0 0.0
    %418 = vmatpush1.msra.mxu0 0.0
    %419 = vmatprep.subr.mxu0 0.0
    %420 = vmatpush1.msra.mxu0 0.0
    %421 = vmatprep.subr.mxu0 0.0
    %422 = vmatpush1.msra.mxu0 0.0
    %423 = vmatprep.subr.mxu0 0.0
    %424 = vmatpush1.msra.mxu0 0.0
    %425 = vmatprep.subr.mxu0 0.0
    %426 = vmatpush1.msra.mxu0 0.0
    %427 = vmatprep.subr.mxu0 0.0
    %428 = vmatpush1.msra.mxu0 0.0
    %429 = vmatprep.subr.mxu0 0.0
    %430 = vmatpush1.msra.mxu0 0.0
    %431 = vmatprep.subr.mxu0 0.0
    %432 = vmatpush1.msra.mxu0 0.0
    %433 = vmatprep.subr.mxu0 0.0
    %434 = vmatpush1.msra.mxu0 0.0
    %435 = vmatprep.subr.mxu0 0.0
    %436 = vmatpush1.msra.mxu0 0.0
    %437 = vmatprep.subr.mxu0 0.0
    %438 = vmatpush1.msra.mxu0 0.0
    %439 = vmatprep.subr.mxu0 0.0
    %440 = vmatpush1.msra.mxu0 0.0
    %441 = vmatprep.subr.mxu0 0.0
    %442 = vmatpush1.msra.mxu0 0.0
    %443 = vmatprep.subr.mxu0 0.0
    %444 = vmatpush1.msra.mxu0 0.0
    %445 = vmatprep.subr.mxu0 0.0
    %446 = vmatpush1.msra.mxu0 0.0
    %447 = vmatprep.subr.mxu0 0.0
    %448 = vmatpush1.msra.mxu0 0.0
    %449 = vmatprep.subr.mxu0 0.0
    %450 = vmatpush1.msra.mxu0 0.0
    %451 = vmatprep.subr.mxu0 0.0
    %452 = vmatpush1.msra.mxu0 0.0
    %453 = vmatprep.subr.mxu0 0.0
    %454 = vmatpush1.msra.mxu0 0.0
    %455 = vmatprep.subr.mxu0 0.0
    %456 = vmatpush1.msra.mxu0 0.0
    %457 = vmatprep.subr.mxu0 0.0
    %458 = vmatpush1.msra.mxu0 0.0
    %459 = vmatprep.subr.mxu0 0.0
    %460 = vmatpush1.msra.mxu0 0.0
    %461 = vmatprep.subr.mxu0 0.0
    %462 = vmatpush1.msra.mxu0 0.0
    %463 = vmatprep.subr.mxu0 0.0
    %464 = vmatpush1.msra.mxu0 0.0
    %465 = vmatprep.subr.mxu0 0.0
    %466 = vmatpush1.msra.mxu0 0.0
    %467 = vmatprep.subr.mxu0 0.0
    %468 = vmatpush1.msra.mxu0 0.0
    %469 = vmatprep.subr.mxu0 0.0
    %470 = vmatpush1.msra.mxu0 0.0
    %471 = vmatprep.subr.mxu0 0.0
    %472 = vmatpush1.msra.mxu0 0.0
    %473 = vmatprep.subr.mxu0 0.0
    %474 = vmatpush1.msra.mxu0 0.0
    %475 = vmatprep.subr.mxu0 0.0
    %476 = vmatpush1.msra.mxu0 0.0
    %477 = vmatprep.mubr.f32.mxu0 0.0
    %478 = vmatmul.mubr.f32.gmra.mrb[0].mxu0 %v340
    %v479 = vpop.f32.mrb[0].mxu0
    %v480 = vadd.f32 0.0, %v479
    %v481 = vpop.f32.mrb[0].mxu0
    %482 = vdwg.mxu0
    %v483 = vadd.f32 %v251, %v409
    %v484 = vadd.f32 %v253, %v411
    %v485 = vadd.f32 %v322, %v480
    %s486 = scalar_lea.vmem %s1, 24
    %v487 = vld [vmem:[%s486] sm:$0xff]
    %488 = vrot.lane.b32.xlu0 %v15, 110
    %v489 = vpop.permute.xlu0 %488
    %490 = vrot.lane.b32.xlu0 %v16, 110
    %v491 = vpop.permute.xlu0 %490
    %492 = vrot.lane.b32.xlu0 %v17, 110
    %v493 = vpop.permute.xlu0 %492
    %vm494 = vcmask 900096
    %v495 = vsel %vm494, %v489, %v491
    %v496 = vsel %vm494, %v491, %v493
    %v501 = vsel %vm36, %v487, 0
    %503 = vmatprep.subr.mxu0 %v496
    %504 = vmatpush1.msra.mxu0 %v495
    %505 = vmatprep.subr.mxu0 0.0
    %506 = vmatpush1.msra.mxu0 0.0
    %507 = vmatprep.subr.mxu0 0.0
    %508 = vmatpush1.msra.mxu0 0.0
    %509 = vmatprep.subr.mxu0 0.0
    %510 = vmatpush1.msra.mxu0 0.0
    %511 = vmatprep.subr.mxu0 0.0
    %512 = vmatpush1.msra.mxu0 0.0
    %513 = vmatprep.subr.mxu0 0.0
    %514 = vmatpush1.msra.mxu0 0.0
    %515 = vmatprep.subr.mxu0 0.0
    %516 = vmatpush1.msra.mxu0 0.0
    %517 = vmatprep.subr.mxu0 0.0
    %518 = vmatpush1.msra.mxu0 0.0
    %519 = vmatprep.subr.mxu0 0.0
    %520 = vmatpush1.msra.mxu0 0.0
    %521 = vmatprep.subr.mxu0 0.0
    %522 = vmatpush1.msra.mxu0 0.0
    %523 = vmatprep.subr.mxu0 0.0
    %524 = vmatpush1.msra.mxu0 0.0
    %525 = vmatprep.subr.mxu0 0.0
    %526 = vmatpush1.msra.mxu0 0.0
    %527 = vmatprep.subr.mxu0 0.0
    %528 = vmatpush1.msra.mxu0 0.0
    %529 = vmatprep.subr.mxu0 0.0
    %530 = vmatpush1.msra.mxu0 0.0
    %531 = vmatprep.subr.mxu0 0.0
    %532 = vmatpush1.msra.mxu0 0.0
    %533 = vmatprep.subr.mxu0 0.0
    %534 = vmatpush1.msra.mxu0 0.0
    %535 = vmatprep.subr.mxu0 0.0
    %536 = vmatpush1.msra.mxu0 0.0
    %537 = vmatprep.subr.mxu0 0.0
    %538 = vmatpush1.msra.mxu0 0.0
    %539 = vmatprep.subr.mxu0 0.0
    %540 = vmatpush1.msra.mxu0 0.0
    %541 = vmatprep.subr.mxu0 0.0
    %542 = vmatpush1.msra.mxu0 0.0
    %543 = vmatprep.subr.mxu0 0.0
    %544 = vmatpush1.msra.mxu0 0.0
    %545 = vmatprep.subr.mxu0 0.0
    %546 = vmatpush1.msra.mxu0 0.0
    %547 = vmatprep.subr.mxu0 0.0
    %548 = vmatpush1.msra.mxu0 0.0
    %549 = vmatprep.subr.mxu0 0.0
    %550 = vmatpush1.msra.mxu0 0.0
    %551 = vmatprep.subr.mxu0 0.0
    %552 = vmatpush1.msra.mxu0 0.0
    %553 = vmatprep.subr.mxu0 0.0
    %554 = vmatpush1.msra.mxu0 0.0
    %555 = vmatprep.subr.mxu0 0.0
    %556 = vmatpush1.msra.mxu0 0.0
    %557 = vmatprep.subr.mxu0 0.0
    %558 = vmatpush1.msra.mxu0 0.0
    %559 = vmatprep.subr.mxu0 0.0
    %560 = vmatpush1.msra.mxu0 0.0
    %561 = vmatprep.subr.mxu0 0.0
    %562 = vmatpush1.msra.mxu0 0.0
    %563 = vmatprep.subr.mxu0 0.0
    %564 = vmatpush1.msra.mxu0 0.0
    %565 = vmatprep.subr.mxu0 0.0
    %566 = vmatpush1.msra.mxu0 0.0
    %567 = vmatprep.mubr.f32.mxu0 0.0
    %568 = vmatmul.mubr.f32.gmra.mrb[0].mxu0 %v501
    %v569 = vpop.f32.mrb[0].mxu0
    %v570 = vadd.f32 0.0, %v569
    %v571 = vpop.f32.mrb[0].mxu0
    %v572 = vadd.f32 0.0, %v571
    %573 = vdwg.mxu0
    %574 = vmatprep.subr.mxu0 0.0
    %575 = vmatpush1.msra.mxu0 %v493
    %576 = vmatprep.subr.mxu0 0.0
    %577 = vmatpush1.msra.mxu0 0.0
    %578 = vmatprep.subr.mxu0 0.0
    %579 = vmatpush1.msra.mxu0 0.0
    %580 = vmatprep.subr.mxu0 0.0
    %581 = vmatpush1.msra.mxu0 0.0
    %582 = vmatprep.subr.mxu0 0.0
    %583 = vmatpush1.msra.mxu0 0.0
    %584 = vmatprep.subr.mxu0 0.0
    %585 = vmatpush1.msra.mxu0 0.0
    %586 = vmatprep.subr.mxu0 0.0
    %587 = vmatpush1.msra.mxu0 0.0
    %588 = vmatprep.subr.mxu0 0.0
    %589 = vmatpush1.msra.mxu0 0.0
    %590 = vmatprep.subr.mxu0 0.0
    %591 = vmatpush1.msra.mxu0 0.0
    %592 = vmatprep.subr.mxu0 0.0
    %593 = vmatpush1.msra.mxu0 0.0
    %594 = vmatprep.subr.mxu0 0.0
    %595 = vmatpush1.msra.mxu0 0.0
    %596 = vmatprep.subr.mxu0 0.0
    %597 = vmatpush1.msra.mxu0 0.0
    %598 = vmatprep.subr.mxu0 0.0
    %599 = vmatpush1.msra.mxu0 0.0
    %600 = vmatprep.subr.mxu0 0.0
    %601 = vmatpush1.msra.mxu0 0.0
    %602 = vmatprep.subr.mxu0 0.0
    %603 = vmatpush1.msra.mxu0 0.0
    %604 = vmatprep.subr.mxu0 0.0
    %605 = vmatpush1.msra.mxu0 0.0
    %606 = vmatprep.subr.mxu0 0.0
    %607 = vmatpush1.msra.mxu0 0.0
    %608 = vmatprep.subr.mxu0 0.0
    %609 = vmatpush1.msra.mxu0 0.0
    %610 = vmatprep.subr.mxu0 0.0
    %611 = vmatpush1.msra.mxu0 0.0
    %612 = vmatprep.subr.mxu0 0.0
    %613 = vmatpush1.msra.mxu0 0.0
    %614 = vmatprep.subr.mxu0 0.0
    %615 = vmatpush1.msra.mxu0 0.0
    %616 = vmatprep.subr.mxu0 0.0
    %617 = vmatpush1.msra.mxu0 0.0
    %618 = vmatprep.subr.mxu0 0.0
    %619 = vmatpush1.msra.mxu0 0.0
    %620 = vmatprep.subr.mxu0 0.0
    %621 = vmatpush1.msra.mxu0 0.0
    %622 = vmatprep.subr.mxu0 0.0
    %623 = vmatpush1.msra.mxu0 0.0
    %624 = vmatprep.subr.mxu0 0.0
    %625 = vmatpush1.msra.mxu0 0.0
    %626 = vmatprep.subr.mxu0 0.0
    %627 = vmatpush1.msra.mxu0 0.0
    %628 = vmatprep.subr.mxu0 0.0
    %629 = vmatpush1.msra.mxu0 0.0
    %630 = vmatprep.subr.mxu0 0.0
    %631 = vmatpush1.msra.mxu0 0.0
    %632 = vmatprep.subr.mxu0 0.0
    %633 = vmatpush1.msra.mxu0 0.0
    %634 = vmatprep.subr.mxu0 0.0
    %635 = vmatpush1.msra.mxu0 0.0
    %636 = vmatprep.subr.mxu0 0.0
    %637 = vmatpush1.msra.mxu0 0.0
    %638 = vmatprep.mubr.f32.mxu0 0.0
    %639 = vmatmul.mubr.f32.gmra.mrb[0].mxu0 %v501
    %v640 = vpop.f32.mrb[0].mxu0
    %v641 = vadd.f32 0.0, %v640
    %v642 = vpop.f32.mrb[0].mxu0
    %643 = vdwg.mxu0
    %v644 = vadd.f32 %v483, %v570
    %v645 = vadd.f32 %v484, %v572
    %v646 = vadd.f32 %v485, %v641
    %s647 = scalar_lea.vmem %s1, 32
    %v648 = vld [vmem:[%s647] sm:$0xff]
    %649 = vrot.lane.b32.xlu0 %v15, 109
    %v650 = vpop.permute.xlu0 %649
    %651 = vrot.lane.b32.xlu0 %v16, 109
    %v652 = vpop.permute.xlu0 %651
    %653 = vrot.lane.b32.xlu0 %v17, 109
    %v654 = vpop.permute.xlu0 %653
    %vm655 = vcmask 891904
    %v656 = vsel %vm655, %v650, %v652
    %v657 = vsel %vm655, %v652, %v654
    %v662 = vsel %vm36, %v648, 0
    %664 = vmatprep.subr.mxu0 %v657
    %665 = vmatpush1.msra.mxu0 %v656
    %666 = vmatprep.subr.mxu0 0.0
    %667 = vmatpush1.msra.mxu0 0.0
    %668 = vmatprep.subr.mxu0 0.0
    %669 = vmatpush1.msra.mxu0 0.0
    %670 = vmatprep.subr.mxu0 0.0
    %671 = vmatpush1.msra.mxu0 0.0
    %672 = vmatprep.subr.mxu0 0.0
    %673 = vmatpush1.msra.mxu0 0.0
    %674 = vmatprep.subr.mxu0 0.0
    %675 = vmatpush1.msra.mxu0 0.0
    %676 = vmatprep.subr.mxu0 0.0
    %677 = vmatpush1.msra.mxu0 0.0
    %678 = vmatprep.subr.mxu0 0.0
    %679 = vmatpush1.msra.mxu0 0.0
    %680 = vmatprep.subr.mxu0 0.0
    %681 = vmatpush1.msra.mxu0 0.0
    %682 = vmatprep.subr.mxu0 0.0
    %683 = vmatpush1.msra.mxu0 0.0
    %684 = vmatprep.subr.mxu0 0.0
    %685 = vmatpush1.msra.mxu0 0.0
    %686 = vmatprep.subr.mxu0 0.0
    %687 = vmatpush1.msra.mxu0 0.0
    %688 = vmatprep.subr.mxu0 0.0
    %689 = vmatpush1.msra.mxu0 0.0
    %690 = vmatprep.subr.mxu0 0.0
    %691 = vmatpush1.msra.mxu0 0.0
    %692 = vmatprep.subr.mxu0 0.0
    %693 = vmatpush1.msra.mxu0 0.0
    %694 = vmatprep.subr.mxu0 0.0
    %695 = vmatpush1.msra.mxu0 0.0
    %696 = vmatprep.subr.mxu0 0.0
    %697 = vmatpush1.msra.mxu0 0.0
    %698 = vmatprep.subr.mxu0 0.0
    %699 = vmatpush1.msra.mxu0 0.0
    %700 = vmatprep.subr.mxu0 0.0
    %701 = vmatpush1.msra.mxu0 0.0
    %702 = vmatprep.subr.mxu0 0.0
    %703 = vmatpush1.msra.mxu0 0.0
    %704 = vmatprep.subr.mxu0 0.0
    %705 = vmatpush1.msra.mxu0 0.0
    %706 = vmatprep.subr.mxu0 0.0
    %707 = vmatpush1.msra.mxu0 0.0
    %708 = vmatprep.subr.mxu0 0.0
    %709 = vmatpush1.msra.mxu0 0.0
    %710 = vmatprep.subr.mxu0 0.0
    %711 = vmatpush1.msra.mxu0 0.0
    %712 = vmatprep.subr.mxu0 0.0
    %713 = vmatpush1.msra.mxu0 0.0
    %714 = vmatprep.subr.mxu0 0.0
    %715 = vmatpush1.msra.mxu0 0.0
    %716 = vmatprep.subr.mxu0 0.0
    %717 = vmatpush1.msra.mxu0 0.0
    %718 = vmatprep.subr.mxu0 0.0
    %719 = vmatpush1.msra.mxu0 0.0
    %720 = vmatprep.subr.mxu0 0.0
    %721 = vmatpush1.msra.mxu0 0.0
    %722 = vmatprep.subr.mxu0 0.0
    %723 = vmatpush1.msra.mxu0 0.0
    %724 = vmatprep.subr.mxu0 0.0
    %725 = vmatpush1.msra.mxu0 0.0
    %726 = vmatprep.subr.mxu0 0.0
    %727 = vmatpush1.msra.mxu0 0.0
    %728 = vmatprep.mubr.f32.mxu0 0.0
    %729 = vmatmul.mubr.f32.gmra.mrb[0].mxu0 %v662
    %v730 = vpop.f32.mrb[0].mxu0
    %v731 = vadd.f32 0.0, %v730
    %v732 = vpop.f32.mrb[0].mxu0
    %v733 = vadd.f32 0.0, %v732
    %734 = vdwg.mxu0
    %735 = vmatprep.subr.mxu0 0.0
    %736 = vmatpush1.msra.mxu0 %v654
    %737 = vmatprep.subr.mxu0 0.0
    %738 = vmatpush1.msra.mxu0 0.0
    %739 = vmatprep.subr.mxu0 0.0
    %740 = vmatpush1.msra.mxu0 0.0
    %741 = vmatprep.subr.mxu0 0.0
    %742 = vmatpush1.msra.mxu0 0.0
    %743 = vmatprep.subr.mxu0 0.0
    %744 = vmatpush1.msra.mxu0 0.0
    %745 = vmatprep.subr.mxu0 0.0
    %746 = vmatpush1.msra.mxu0 0.0
    %747 = vmatprep.subr.mxu0 0.0
    %748 = vmatpush1.msra.mxu0 0.0
    %749 = vmatprep.subr.mxu0 0.0
    %750 = vmatpush1.msra.mxu0 0.0
    %751 = vmatprep.subr.mxu0 0.0
    %752 = vmatpush1.msra.mxu0 0.0
    %753 = vmatprep.subr.mxu0 0.0
    %754 = vmatpush1.msra.mxu0 0.0
    %755 = vmatprep.subr.mxu0 0.0
    %756 = vmatpush1.msra.mxu0 0.0
    %757 = vmatprep.subr.mxu0 0.0
    %758 = vmatpush1.msra.mxu0 0.0
    %759 = vmatprep.subr.mxu0 0.0
    %760 = vmatpush1.msra.mxu0 0.0
    %761 = vmatprep.subr.mxu0 0.0
    %762 = vmatpush1.msra.mxu0 0.0
    %763 = vmatprep.subr.mxu0 0.0
    %764 = vmatpush1.msra.mxu0 0.0
    %765 = vmatprep.subr.mxu0 0.0
    %766 = vmatpush1.msra.mxu0 0.0
    %767 = vmatprep.subr.mxu0 0.0
    %768 = vmatpush1.msra.mxu0 0.0
    %769 = vmatprep.subr.mxu0 0.0
    %770 = vmatpush1.msra.mxu0 0.0
    %771 = vmatprep.subr.mxu0 0.0
    %772 = vmatpush1.msra.mxu0 0.0
    %773 = vmatprep.subr.mxu0 0.0
    %774 = vmatpush1.msra.mxu0 0.0
    %775 = vmatprep.subr.mxu0 0.0
    %776 = vmatpush1.msra.mxu0 0.0
    %777 = vmatprep.subr.mxu0 0.0
    %778 = vmatpush1.msra.mxu0 0.0
    %779 = vmatprep.subr.mxu0 0.0
    %780 = vmatpush1.msra.mxu0 0.0
    %781 = vmatprep.subr.mxu0 0.0
    %782 = vmatpush1.msra.mxu0 0.0
    %783 = vmatprep.subr.mxu0 0.0
    %784 = vmatpush1.msra.mxu0 0.0
    %785 = vmatprep.subr.mxu0 0.0
    %786 = vmatpush1.msra.mxu0 0.0
    %787 = vmatprep.subr.mxu0 0.0
    %788 = vmatpush1.msra.mxu0 0.0
    %789 = vmatprep.subr.mxu0 0.0
    %790 = vmatpush1.msra.mxu0 0.0
    %791 = vmatprep.subr.mxu0 0.0
    %792 = vmatpush1.msra.mxu0 0.0
    %793 = vmatprep.subr.mxu0 0.0
    %794 = vmatpush1.msra.mxu0 0.0
    %795 = vmatprep.subr.mxu0 0.0
    %796 = vmatpush1.msra.mxu0 0.0
    %797 = vmatprep.subr.mxu0 0.0
    %798 = vmatpush1.msra.mxu0 0.0
    %799 = vmatprep.mubr.f32.mxu0 0.0
    %800 = vmatmul.mubr.f32.gmra.mrb[0].mxu0 %v662
    %v801 = vpop.f32.mrb[0].mxu0
    %v802 = vadd.f32 0.0, %v801
    %v803 = vpop.f32.mrb[0].mxu0
    %804 = vdwg.mxu0
    %v805 = vadd.f32 %v644, %v731
    %v806 = vadd.f32 %v645, %v733
    %v807 = vadd.f32 %v646, %v802
    %s808 = scalar_lea.vmem %s1, 40
    %v809 = vld [vmem:[%s808] sm:$0xff]
    %810 = vrot.lane.b32.xlu0 %v15, 108
    %v811 = vpop.permute.xlu0 %810
    %812 = vrot.lane.b32.xlu0 %v16, 108
    %v813 = vpop.permute.xlu0 %812
    %814 = vrot.lane.b32.xlu0 %v17, 108
    %v815 = vpop.permute.xlu0 %814
    %vm816 = vcmask 883712
    %v817 = vsel %vm816, %v811, %v813
    %v818 = vsel %vm816, %v813, %v815
    %v823 = vsel %vm36, %v809, 0
    %825 = vmatprep.subr.mxu0 %v818
    %826 = vmatpush1.msra.mxu0 %v817
    %827 = vmatprep.subr.mxu0 0.0
    %828 = vmatpush1.msra.mxu0 0.0
    %829 = vmatprep.subr.mxu0 0.0
    %830 = vmatpush1.msra.mxu0 0.0
    %831 = vmatprep.subr.mxu0 0.0
    %832 = vmatpush1.msra.mxu0 0.0
    %833 = vmatprep.subr.mxu0 0.0
    %834 = vmatpush1.msra.mxu0 0.0
    %835 = vmatprep.subr.mxu0 0.0
    %836 = vmatpush1.msra.mxu0 0.0
    %837 = vmatprep.subr.mxu0 0.0
    %838 = vmatpush1.msra.mxu0 0.0
    %839 = vmatprep.subr.mxu0 0.0
    %840 = vmatpush1.msra.mxu0 0.0
    %841 = vmatprep.subr.mxu0 0.0
    %842 = vmatpush1.msra.mxu0 0.0
    %843 = vmatprep.subr.mxu0 0.0
    %844 = vmatpush1.msra.mxu0 0.0
    %845 = vmatprep.subr.mxu0 0.0
    %846 = vmatpush1.msra.mxu0 0.0
    %847 = vmatprep.subr.mxu0 0.0
    %848 = vmatpush1.msra.mxu0 0.0
    %849 = vmatprep.subr.mxu0 0.0
    %850 = vmatpush1.msra.mxu0 0.0
    %851 = vmatprep.subr.mxu0 0.0
    %852 = vmatpush1.msra.mxu0 0.0
    %853 = vmatprep.subr.mxu0 0.0
    %854 = vmatpush1.msra.mxu0 0.0
    %855 = vmatprep.subr.mxu0 0.0
    %856 = vmatpush1.msra.mxu0 0.0
    %857 = vmatprep.subr.mxu0 0.0
    %858 = vmatpush1.msra.mxu0 0.0
    %859 = vmatprep.subr.mxu0 0.0
    %860 = vmatpush1.msra.mxu0 0.0
    %861 = vmatprep.subr.mxu0 0.0
    %862 = vmatpush1.msra.mxu0 0.0
    %863 = vmatprep.subr.mxu0 0.0
    %864 = vmatpush1.msra.mxu0 0.0
    %865 = vmatprep.subr.mxu0 0.0
    %866 = vmatpush1.msra.mxu0 0.0
    %867 = vmatprep.subr.mxu0 0.0
    %868 = vmatpush1.msra.mxu0 0.0
    %869 = vmatprep.subr.mxu0 0.0
    %870 = vmatpush1.msra.mxu0 0.0
    %871 = vmatprep.subr.mxu0 0.0
    %872 = vmatpush1.msra.mxu0 0.0
    %873 = vmatprep.subr.mxu0 0.0
    %874 = vmatpush1.msra.mxu0 0.0
    %875 = vmatprep.subr.mxu0 0.0
    %876 = vmatpush1.msra.mxu0 0.0
    %877 = vmatprep.subr.mxu0 0.0
    %878 = vmatpush1.msra.mxu0 0.0
    %879 = vmatprep.subr.mxu0 0.0
    %880 = vmatpush1.msra.mxu0 0.0
    %881 = vmatprep.subr.mxu0 0.0
    %882 = vmatpush1.msra.mxu0 0.0
    %883 = vmatprep.subr.mxu0 0.0
    %884 = vmatpush1.msra.mxu0 0.0
    %885 = vmatprep.subr.mxu0 0.0
    %886 = vmatpush1.msra.mxu0 0.0
    %887 = vmatprep.subr.mxu0 0.0
    %888 = vmatpush1.msra.mxu0 0.0
    %889 = vmatprep.mubr.f32.mxu0 0.0
    %890 = vmatmul.mubr.f32.gmra.mrb[0].mxu0 %v823
    %v891 = vpop.f32.mrb[0].mxu0
    %v892 = vadd.f32 0.0, %v891
    %v893 = vpop.f32.mrb[0].mxu0
    %v894 = vadd.f32 0.0, %v893
    %895 = vdwg.mxu0
    %896 = vmatprep.subr.mxu0 0.0
    %897 = vmatpush1.msra.mxu0 %v815
    %898 = vmatprep.subr.mxu0 0.0
    %899 = vmatpush1.msra.mxu0 0.0
    %900 = vmatprep.subr.mxu0 0.0
    %901 = vmatpush1.msra.mxu0 0.0
    %902 = vmatprep.subr.mxu0 0.0
    %903 = vmatpush1.msra.mxu0 0.0
    %904 = vmatprep.subr.mxu0 0.0
    %905 = vmatpush1.msra.mxu0 0.0
    %906 = vmatprep.subr.mxu0 0.0
    %907 = vmatpush1.msra.mxu0 0.0
    %908 = vmatprep.subr.mxu0 0.0
    %909 = vmatpush1.msra.mxu0 0.0
    %910 = vmatprep.subr.mxu0 0.0
    %911 = vmatpush1.msra.mxu0 0.0
    %912 = vmatprep.subr.mxu0 0.0
    %913 = vmatpush1.msra.mxu0 0.0
    %914 = vmatprep.subr.mxu0 0.0
    %915 = vmatpush1.msra.mxu0 0.0
    %916 = vmatprep.subr.mxu0 0.0
    %917 = vmatpush1.msra.mxu0 0.0
    %918 = vmatprep.subr.mxu0 0.0
    %919 = vmatpush1.msra.mxu0 0.0
    %920 = vmatprep.subr.mxu0 0.0
    %921 = vmatpush1.msra.mxu0 0.0
    %922 = vmatprep.subr.mxu0 0.0
    %923 = vmatpush1.msra.mxu0 0.0
    %924 = vmatprep.subr.mxu0 0.0
    %925 = vmatpush1.msra.mxu0 0.0
    %926 = vmatprep.subr.mxu0 0.0
    %927 = vmatpush1.msra.mxu0 0.0
    %928 = vmatprep.subr.mxu0 0.0
    %929 = vmatpush1.msra.mxu0 0.0
    %930 = vmatprep.subr.mxu0 0.0
    %931 = vmatpush1.msra.mxu0 0.0
    %932 = vmatprep.subr.mxu0 0.0
    %933 = vmatpush1.msra.mxu0 0.0
    %934 = vmatprep.subr.mxu0 0.0
    %935 = vmatpush1.msra.mxu0 0.0
    %936 = vmatprep.subr.mxu0 0.0
    %937 = vmatpush1.msra.mxu0 0.0
    %938 = vmatprep.subr.mxu0 0.0
    %939 = vmatpush1.msra.mxu0 0.0
    %940 = vmatprep.subr.mxu0 0.0
    %941 = vmatpush1.msra.mxu0 0.0
    %942 = vmatprep.subr.mxu0 0.0
    %943 = vmatpush1.msra.mxu0 0.0
    %944 = vmatprep.subr.mxu0 0.0
    %945 = vmatpush1.msra.mxu0 0.0
    %946 = vmatprep.subr.mxu0 0.0
    %947 = vmatpush1.msra.mxu0 0.0
    %948 = vmatprep.subr.mxu0 0.0
    %949 = vmatpush1.msra.mxu0 0.0
    %950 = vmatprep.subr.mxu0 0.0
    %951 = vmatpush1.msra.mxu0 0.0
    %952 = vmatprep.subr.mxu0 0.0
    %953 = vmatpush1.msra.mxu0 0.0
    %954 = vmatprep.subr.mxu0 0.0
    %955 = vmatpush1.msra.mxu0 0.0
    %956 = vmatprep.subr.mxu0 0.0
    %957 = vmatpush1.msra.mxu0 0.0
    %958 = vmatprep.subr.mxu0 0.0
    %959 = vmatpush1.msra.mxu0 0.0
    %960 = vmatprep.mubr.f32.mxu0 0.0
    %961 = vmatmul.mubr.f32.gmra.mrb[0].mxu0 %v823
    %v962 = vpop.f32.mrb[0].mxu0
    %v963 = vadd.f32 0.0, %v962
    %v964 = vpop.f32.mrb[0].mxu0
    %965 = vdwg.mxu0
    %v966 = vadd.f32 %v805, %v892
    %v967 = vadd.f32 %v806, %v894
    %v968 = vadd.f32 %v807, %v963
    %s969 = scalar_lea.vmem %s1, 48
    %v970 = vld [vmem:[%s969] sm:$0xff]
    %971 = vrot.lane.b32.xlu0 %v15, 92
    %v972 = vpop.permute.xlu0 %971
    %973 = vrot.lane.b32.xlu0 %v16, 92
    %v974 = vpop.permute.xlu0 %973
    %975 = vrot.lane.b32.xlu0 %v17, 92
    %v976 = vpop.permute.xlu0 %975
    %vm977 = vcmask 752640
    %v978 = vsel %vm977, %v972, %v974
    %v979 = vsel %vm977, %v974, %v976
    %v984 = vsel %vm36, %v970, 0
    %986 = vmatprep.subr.mxu0 %v979
    %987 = vmatpush1.msra.mxu0 %v978
    %988 = vmatprep.subr.mxu0 0.0
    %989 = vmatpush1.msra.mxu0 0.0
    %990 = vmatprep.subr.mxu0 0.0
    %991 = vmatpush1.msra.mxu0 0.0
    %992 = vmatprep.subr.mxu0 0.0
    %993 = vmatpush1.msra.mxu0 0.0
    %994 = vmatprep.subr.mxu0 0.0
    %995 = vmatpush1.msra.mxu0 0.0
    %996 = vmatprep.subr.mxu0 0.0
    %997 = vmatpush1.msra.mxu0 0.0
    %998 = vmatprep.subr.mxu0 0.0
    %999 = vmatpush1.msra.mxu0 0.0
    %1000 = vmatprep.subr.mxu0 0.0
    %1001 = vmatpush1.msra.mxu0 0.0
    %1002 = vmatprep.subr.mxu0 0.0
    %1003 = vmatpush1.msra.mxu0 0.0
    %1004 = vmatprep.subr.mxu0 0.0
    %1005 = vmatpush1.msra.mxu0 0.0
    %1006 = vmatprep.subr.mxu0 0.0
    %1007 = vmatpush1.msra.mxu0 0.0
    %1008 = vmatprep.subr.mxu0 0.0
    %1009 = vmatpush1.msra.mxu0 0.0
    %1010 = vmatprep.subr.mxu0 0.0
    %1011 = vmatpush1.msra.mxu0 0.0
    %1012 = vmatprep.subr.mxu0 0.0
    %1013 = vmatpush1.msra.mxu0 0.0
    %1014 = vmatprep.subr.mxu0 0.0
    %1015 = vmatpush1.msra.mxu0 0.0
    %1016 = vmatprep.subr.mxu0 0.0
    %1017 = vmatpush1.msra.mxu0 0.0
    %1018 = vmatprep.subr.mxu0 0.0
    %1019 = vmatpush1.msra.mxu0 0.0
    %1020 = vmatprep.subr.mxu0 0.0
    %1021 = vmatpush1.msra.mxu0 0.0
    %1022 = vmatprep.subr.mxu0 0.0
    %1023 = vmatpush1.msra.mxu0 0.0
    %1024 = vmatprep.subr.mxu0 0.0
    %1025 = vmatpush1.msra.mxu0 0.0
    %1026 = vmatprep.subr.mxu0 0.0
    %1027 = vmatpush1.msra.mxu0 0.0
    %1028 = vmatprep.subr.mxu0 0.0
    %1029 = vmatpush1.msra.mxu0 0.0
    %1030 = vmatprep.subr.mxu0 0.0
    %1031 = vmatpush1.msra.mxu0 0.0
    %1032 = vmatprep.subr.mxu0 0.0
    %1033 = vmatpush1.msra.mxu0 0.0
    %1034 = vmatprep.subr.mxu0 0.0
    %1035 = vmatpush1.msra.mxu0 0.0
    %1036 = vmatprep.subr.mxu0 0.0
    %1037 = vmatpush1.msra.mxu0 0.0
    %1038 = vmatprep.subr.mxu0 0.0
    %1039 = vmatpush1.msra.mxu0 0.0
    %1040 = vmatprep.subr.mxu0 0.0
    %1041 = vmatpush1.msra.mxu0 0.0
    %1042 = vmatprep.subr.mxu0 0.0
    %1043 = vmatpush1.msra.mxu0 0.0
    %1044 = vmatprep.subr.mxu0 0.0
    %1045 = vmatpush1.msra.mxu0 0.0
    %1046 = vmatprep.subr.mxu0 0.0
    %1047 = vmatpush1.msra.mxu0 0.0
    %1048 = vmatprep.subr.mxu0 0.0
    %1049 = vmatpush1.msra.mxu0 0.0
    %1050 = vmatprep.mubr.f32.mxu0 0.0
    %1051 = vmatmul.mubr.f32.gmra.mrb[0].mxu0 %v984
    %v1052 = vpop.f32.mrb[0].mxu0
    %v1053 = vadd.f32 0.0, %v1052
    %v1054 = vpop.f32.mrb[0].mxu0
    %v1055 = vadd.f32 0.0, %v1054
    %1056 = vdwg.mxu0
    %1057 = vmatprep.subr.mxu0 0.0
    %1058 = vmatpush1.msra.mxu0 %v976
    %1059 = vmatprep.subr.mxu0 0.0
    %1060 = vmatpush1.msra.mxu0 0.0
    %1061 = vmatprep.subr.mxu0 0.0
    %1062 = vmatpush1.msra.mxu0 0.0
    %1063 = vmatprep.subr.mxu0 0.0
    %1064 = vmatpush1.msra.mxu0 0.0
    %1065 = vmatprep.subr.mxu0 0.0
    %1066 = vmatpush1.msra.mxu0 0.0
    %1067 = vmatprep.subr.mxu0 0.0
    %1068 = vmatpush1.msra.mxu0 0.0
    %1069 = vmatprep.subr.mxu0 0.0
    %1070 = vmatpush1.msra.mxu0 0.0
    %1071 = vmatprep.subr.mxu0 0.0
    %1072 = vmatpush1.msra.mxu0 0.0
    %1073 = vmatprep.subr.mxu0 0.0
    %1074 = vmatpush1.msra.mxu0 0.0
    %1075 = vmatprep.subr.mxu0 0.0
    %1076 = vmatpush1.msra.mxu0 0.0
    %1077 = vmatprep.subr.mxu0 0.0
    %1078 = vmatpush1.msra.mxu0 0.0
    %1079 = vmatprep.subr.mxu0 0.0
    %1080 = vmatpush1.msra.mxu0 0.0
    %1081 = vmatprep.subr.mxu0 0.0
    %1082 = vmatpush1.msra.mxu0 0.0
    %1083 = vmatprep.subr.mxu0 0.0
    %1084 = vmatpush1.msra.mxu0 0.0
    %1085 = vmatprep.subr.mxu0 0.0
    %1086 = vmatpush1.msra.mxu0 0.0
    %1087 = vmatprep.subr.mxu0 0.0
    %1088 = vmatpush1.msra.mxu0 0.0
    %1089 = vmatprep.subr.mxu0 0.0
    %1090 = vmatpush1.msra.mxu0 0.0
    %1091 = vmatprep.subr.mxu0 0.0
    %1092 = vmatpush1.msra.mxu0 0.0
    %1093 = vmatprep.subr.mxu0 0.0
    %1094 = vmatpush1.msra.mxu0 0.0
    %1095 = vmatprep.subr.mxu0 0.0
    %1096 = vmatpush1.msra.mxu0 0.0
    %1097 = vmatprep.subr.mxu0 0.0
    %1098 = vmatpush1.msra.mxu0 0.0
    %1099 = vmatprep.subr.mxu0 0.0
    %1100 = vmatpush1.msra.mxu0 0.0
    %1101 = vmatprep.subr.mxu0 0.0
    %1102 = vmatpush1.msra.mxu0 0.0
    %1103 = vmatprep.subr.mxu0 0.0
    %1104 = vmatpush1.msra.mxu0 0.0
    %1105 = vmatprep.subr.mxu0 0.0
    %1106 = vmatpush1.msra.mxu0 0.0
    %1107 = vmatprep.subr.mxu0 0.0
    %1108 = vmatpush1.msra.mxu0 0.0
    %1109 = vmatprep.subr.mxu0 0.0
    %1110 = vmatpush1.msra.mxu0 0.0
    %1111 = vmatprep.subr.mxu0 0.0
    %1112 = vmatpush1.msra.mxu0 0.0
    %1113 = vmatprep.subr.mxu0 0.0
    %1114 = vmatpush1.msra.mxu0 0.0
    %1115 = vmatprep.subr.mxu0 0.0
    %1116 = vmatpush1.msra.mxu0 0.0
    %1117 = vmatprep.subr.mxu0 0.0
    %1118 = vmatpush1.msra.mxu0 0.0
    %1119 = vmatprep.subr.mxu0 0.0
    %1120 = vmatpush1.msra.mxu0 0.0
    %1121 = vmatprep.mubr.f32.mxu0 0.0
    %1122 = vmatmul.mubr.f32.gmra.mrb[0].mxu0 %v984
    %v1123 = vpop.f32.mrb[0].mxu0
    %v1124 = vadd.f32 0.0, %v1123
    %v1125 = vpop.f32.mrb[0].mxu0
    %1126 = vdwg.mxu0
    %v1127 = vadd.f32 %v966, %v1053
    %v1128 = vadd.f32 %v967, %v1055
    %v1129 = vadd.f32 %v968, %v1124
    %s1130 = scalar_lea.vmem %s1, 56
    %v1131 = vld [vmem:[%s1130] sm:$0xff]
    %1132 = vrot.lane.b32.xlu0 %v15, 91
    %v1133 = vpop.permute.xlu0 %1132
    %1134 = vrot.lane.b32.xlu0 %v16, 91
    %v1135 = vpop.permute.xlu0 %1134
    %1136 = vrot.lane.b32.xlu0 %v17, 91
    %v1137 = vpop.permute.xlu0 %1136
    %vm1138 = vcmask 744448
    %v1139 = vsel %vm1138, %v1133, %v1135
    %v1140 = vsel %vm1138, %v1135, %v1137
    %v1145 = vsel %vm36, %v1131, 0
    %1147 = vmatprep.subr.mxu0 %v1140
    %1148 = vmatpush1.msra.mxu0 %v1139
    %1149 = vmatprep.subr.mxu0 0.0
    %1150 = vmatpush1.msra.mxu0 0.0
    %1151 = vmatprep.subr.mxu0 0.0
    %1152 = vmatpush1.msra.mxu0 0.0
    %1153 = vmatprep.subr.mxu0 0.0
    %1154 = vmatpush1.msra.mxu0 0.0
    %1155 = vmatprep.subr.mxu0 0.0
    %1156 = vmatpush1.msra.mxu0 0.0
    %1157 = vmatprep.subr.mxu0 0.0
    %1158 = vmatpush1.msra.mxu0 0.0
    %1159 = vmatprep.subr.mxu0 0.0
    %1160 = vmatpush1.msra.mxu0 0.0
    %1161 = vmatprep.subr.mxu0 0.0
    %1162 = vmatpush1.msra.mxu0 0.0
    %1163 = vmatprep.subr.mxu0 0.0
    %1164 = vmatpush1.msra.mxu0 0.0
    %1165 = vmatprep.subr.mxu0 0.0
    %1166 = vmatpush1.msra.mxu0 0.0
    %1167 = vmatprep.subr.mxu0 0.0
    %1168 = vmatpush1.msra.mxu0 0.0
    %1169 = vmatprep.subr.mxu0 0.0
    %1170 = vmatpush1.msra.mxu0 0.0
    %1171 = vmatprep.subr.mxu0 0.0
    %1172 = vmatpush1.msra.mxu0 0.0
    %1173 = vmatprep.subr.mxu0 0.0
    %1174 = vmatpush1.msra.mxu0 0.0
    %1175 = vmatprep.subr.mxu0 0.0
    %1176 = vmatpush1.msra.mxu0 0.0
    %1177 = vmatprep.subr.mxu0 0.0
    %1178 = vmatpush1.msra.mxu0 0.0
    %1179 = vmatprep.subr.mxu0 0.0
    %1180 = vmatpush1.msra.mxu0 0.0
    %1181 = vmatprep.subr.mxu0 0.0
    %1182 = vmatpush1.msra.mxu0 0.0
    %1183 = vmatprep.subr.mxu0 0.0
    %1184 = vmatpush1.msra.mxu0 0.0
    %1185 = vmatprep.subr.mxu0 0.0
    %1186 = vmatpush1.msra.mxu0 0.0
    %1187 = vmatprep.subr.mxu0 0.0
    %1188 = vmatpush1.msra.mxu0 0.0
    %1189 = vmatprep.subr.mxu0 0.0
    %1190 = vmatpush1.msra.mxu0 0.0
    %1191 = vmatprep.subr.mxu0 0.0
    %1192 = vmatpush1.msra.mxu0 0.0
    %1193 = vmatprep.subr.mxu0 0.0
    %1194 = vmatpush1.msra.mxu0 0.0
    %1195 = vmatprep.subr.mxu0 0.0
    %1196 = vmatpush1.msra.mxu0 0.0
    %1197 = vmatprep.subr.mxu0 0.0
    %1198 = vmatpush1.msra.mxu0 0.0
    %1199 = vmatprep.subr.mxu0 0.0
    %1200 = vmatpush1.msra.mxu0 0.0
    %1201 = vmatprep.subr.mxu0 0.0
    %1202 = vmatpush1.msra.mxu0 0.0
    %1203 = vmatprep.subr.mxu0 0.0
    %1204 = vmatpush1.msra.mxu0 0.0
    %1205 = vmatprep.subr.mxu0 0.0
    %1206 = vmatpush1.msra.mxu0 0.0
    %1207 = vmatprep.subr.mxu0 0.0
    %1208 = vmatpush1.msra.mxu0 0.0
    %1209 = vmatprep.subr.mxu0 0.0
    %1210 = vmatpush1.msra.mxu0 0.0
    %1211 = vmatprep.mubr.f32.mxu0 0.0
    %1212 = vmatmul.mubr.f32.gmra.mrb[0].mxu0 %v1145
    %v1213 = vpop.f32.mrb[0].mxu0
    %v1214 = vadd.f32 0.0, %v1213
    %v1215 = vpop.f32.mrb[0].mxu0
    %v1216 = vadd.f32 0.0, %v1215
    %1217 = vdwg.mxu0
    %1218 = vmatprep.subr.mxu0 0.0
    %1219 = vmatpush1.msra.mxu0 %v1137
    %1220 = vmatprep.subr.mxu0 0.0
    %1221 = vmatpush1.msra.mxu0 0.0
    %1222 = vmatprep.subr.mxu0 0.0
    %1223 = vmatpush1.msra.mxu0 0.0
    %1224 = vmatprep.subr.mxu0 0.0
    %1225 = vmatpush1.msra.mxu0 0.0
    %1226 = vmatprep.subr.mxu0 0.0
    %1227 = vmatpush1.msra.mxu0 0.0
    %1228 = vmatprep.subr.mxu0 0.0
    %1229 = vmatpush1.msra.mxu0 0.0
    %1230 = vmatprep.subr.mxu0 0.0
    %1231 = vmatpush1.msra.mxu0 0.0
    %1232 = vmatprep.subr.mxu0 0.0
    %1233 = vmatpush1.msra.mxu0 0.0
    %1234 = vmatprep.subr.mxu0 0.0
    %1235 = vmatpush1.msra.mxu0 0.0
    %1236 = vmatprep.subr.mxu0 0.0
    %1237 = vmatpush1.msra.mxu0 0.0
    %1238 = vmatprep.subr.mxu0 0.0
    %1239 = vmatpush1.msra.mxu0 0.0
    %1240 = vmatprep.subr.mxu0 0.0
    %1241 = vmatpush1.msra.mxu0 0.0
    %1242 = vmatprep.subr.mxu0 0.0
    %1243 = vmatpush1.msra.mxu0 0.0
    %1244 = vmatprep.subr.mxu0 0.0
    %1245 = vmatpush1.msra.mxu0 0.0
    %1246 = vmatprep.subr.mxu0 0.0
    %1247 = vmatpush1.msra.mxu0 0.0
    %1248 = vmatprep.subr.mxu0 0.0
    %1249 = vmatpush1.msra.mxu0 0.0
    %1250 = vmatprep.subr.mxu0 0.0
    %1251 = vmatpush1.msra.mxu0 0.0
    %1252 = vmatprep.subr.mxu0 0.0
    %1253 = vmatpush1.msra.mxu0 0.0
    %1254 = vmatprep.subr.mxu0 0.0
    %1255 = vmatpush1.msra.mxu0 0.0
    %1256 = vmatprep.subr.mxu0 0.0
    %1257 = vmatpush1.msra.mxu0 0.0
    %1258 = vmatprep.subr.mxu0 0.0
    %1259 = vmatpush1.msra.mxu0 0.0
    %1260 = vmatprep.subr.mxu0 0.0
    %1261 = vmatpush1.msra.mxu0 0.0
    %1262 = vmatprep.subr.mxu0 0.0
    %1263 = vmatpush1.msra.mxu0 0.0
    %1264 = vmatprep.subr.mxu0 0.0
    %1265 = vmatpush1.msra.mxu0 0.0
    %1266 = vmatprep.subr.mxu0 0.0
    %1267 = vmatpush1.msra.mxu0 0.0
    %1268 = vmatprep.subr.mxu0 0.0
    %1269 = vmatpush1.msra.mxu0 0.0
    %1270 = vmatprep.subr.mxu0 0.0
    %1271 = vmatpush1.msra.mxu0 0.0
    %1272 = vmatprep.subr.mxu0 0.0
    %1273 = vmatpush1.msra.mxu0 0.0
    %1274 = vmatprep.subr.mxu0 0.0
    %1275 = vmatpush1.msra.mxu0 0.0
    %1276 = vmatprep.subr.mxu0 0.0
    %1277 = vmatpush1.msra.mxu0 0.0
    %1278 = vmatprep.subr.mxu0 0.0
    %1279 = vmatpush1.msra.mxu0 0.0
    %1280 = vmatprep.subr.mxu0 0.0
    %1281 = vmatpush1.msra.mxu0 0.0
    %1282 = vmatprep.mubr.f32.mxu0 0.0
    %1283 = vmatmul.mubr.f32.gmra.mrb[0].mxu0 %v1145
    %v1284 = vpop.f32.mrb[0].mxu0
    %v1285 = vadd.f32 0.0, %v1284
    %v1286 = vpop.f32.mrb[0].mxu0
    %1287 = vdwg.mxu0
    %v1288 = vadd.f32 %v1127, %v1214
    %v1289 = vadd.f32 %v1128, %v1216
    %v1290 = vadd.f32 %v1129, %v1285
    %s1291 = scalar_lea.vmem %s1, 64
    %v1292 = vld [vmem:[%s1291] sm:$0xff]
    %1293 = vrot.lane.b32.xlu0 %v15, 90
    %v1294 = vpop.permute.xlu0 %1293
    %1295 = vrot.lane.b32.xlu0 %v16, 90
    %v1296 = vpop.permute.xlu0 %1295
    %1297 = vrot.lane.b32.xlu0 %v17, 90
    %v1298 = vpop.permute.xlu0 %1297
    %vm1299 = vcmask 736256
    %v1300 = vsel %vm1299, %v1294, %v1296
    %v1301 = vsel %vm1299, %v1296, %v1298
    %v1306 = vsel %vm36, %v1292, 0
    %1308 = vmatprep.subr.mxu0 %v1301
    %1309 = vmatpush1.msra.mxu0 %v1300
    %1310 = vmatprep.subr.mxu0 0.0
    %1311 = vmatpush1.msra.mxu0 0.0
    %1312 = vmatprep.subr.mxu0 0.0
    %1313 = vmatpush1.msra.mxu0 0.0
    %1314 = vmatprep.subr.mxu0 0.0
    %1315 = vmatpush1.msra.mxu0 0.0
    %1316 = vmatprep.subr.mxu0 0.0
    %1317 = vmatpush1.msra.mxu0 0.0
    %1318 = vmatprep.subr.mxu0 0.0
    %1319 = vmatpush1.msra.mxu0 0.0
    %1320 = vmatprep.subr.mxu0 0.0
    %1321 = vmatpush1.msra.mxu0 0.0
    %1322 = vmatprep.subr.mxu0 0.0
    %1323 = vmatpush1.msra.mxu0 0.0
    %1324 = vmatprep.subr.mxu0 0.0
    %1325 = vmatpush1.msra.mxu0 0.0
    %1326 = vmatprep.subr.mxu0 0.0
    %1327 = vmatpush1.msra.mxu0 0.0
    %1328 = vmatprep.subr.mxu0 0.0
    %1329 = vmatpush1.msra.mxu0 0.0
    %1330 = vmatprep.subr.mxu0 0.0
    %1331 = vmatpush1.msra.mxu0 0.0
    %1332 = vmatprep.subr.mxu0 0.0
    %1333 = vmatpush1.msra.mxu0 0.0
    %1334 = vmatprep.subr.mxu0 0.0
    %1335 = vmatpush1.msra.mxu0 0.0
    %1336 = vmatprep.subr.mxu0 0.0
    %1337 = vmatpush1.msra.mxu0 0.0
    %1338 = vmatprep.subr.mxu0 0.0
    %1339 = vmatpush1.msra.mxu0 0.0
    %1340 = vmatprep.subr.mxu0 0.0
    %1341 = vmatpush1.msra.mxu0 0.0
    %1342 = vmatprep.subr.mxu0 0.0
    %1343 = vmatpush1.msra.mxu0 0.0
    %1344 = vmatprep.subr.mxu0 0.0
    %1345 = vmatpush1.msra.mxu0 0.0
    %1346 = vmatprep.subr.mxu0 0.0
    %1347 = vmatpush1.msra.mxu0 0.0
    %1348 = vmatprep.subr.mxu0 0.0
    %1349 = vmatpush1.msra.mxu0 0.0
    %1350 = vmatprep.subr.mxu0 0.0
    %1351 = vmatpush1.msra.mxu0 0.0
    %1352 = vmatprep.subr.mxu0 0.0
    %1353 = vmatpush1.msra.mxu0 0.0
    %1354 = vmatprep.subr.mxu0 0.0
    %1355 = vmatpush1.msra.mxu0 0.0
    %1356 = vmatprep.subr.mxu0 0.0
    %1357 = vmatpush1.msra.mxu0 0.0
    %1358 = vmatprep.subr.mxu0 0.0
    %1359 = vmatpush1.msra.mxu0 0.0
    %1360 = vmatprep.subr.mxu0 0.0
    %1361 = vmatpush1.msra.mxu0 0.0
    %1362 = vmatprep.subr.mxu0 0.0
    %1363 = vmatpush1.msra.mxu0 0.0
    %1364 = vmatprep.subr.mxu0 0.0
    %1365 = vmatpush1.msra.mxu0 0.0
    %1366 = vmatprep.subr.mxu0 0.0
    %1367 = vmatpush1.msra.mxu0 0.0
    %1368 = vmatprep.subr.mxu0 0.0
    %1369 = vmatpush1.msra.mxu0 0.0
    %1370 = vmatprep.subr.mxu0 0.0
    %1371 = vmatpush1.msra.mxu0 0.0
    %1372 = vmatprep.mubr.f32.mxu0 0.0
    %1373 = vmatmul.mubr.f32.gmra.mrb[0].mxu0 %v1306
    %v1374 = vpop.f32.mrb[0].mxu0
    %v1375 = vadd.f32 0.0, %v1374
    %v1376 = vpop.f32.mrb[0].mxu0
    %v1377 = vadd.f32 0.0, %v1376
    %1378 = vdwg.mxu0
    %1379 = vmatprep.subr.mxu0 0.0
    %1380 = vmatpush1.msra.mxu0 %v1298
    %1381 = vmatprep.subr.mxu0 0.0
    %1382 = vmatpush1.msra.mxu0 0.0
    %1383 = vmatprep.subr.mxu0 0.0
    %1384 = vmatpush1.msra.mxu0 0.0
    %1385 = vmatprep.subr.mxu0 0.0
    %1386 = vmatpush1.msra.mxu0 0.0
    %1387 = vmatprep.subr.mxu0 0.0
    %1388 = vmatpush1.msra.mxu0 0.0
    %1389 = vmatprep.subr.mxu0 0.0
    %1390 = vmatpush1.msra.mxu0 0.0
    %1391 = vmatprep.subr.mxu0 0.0
    %1392 = vmatpush1.msra.mxu0 0.0
    %1393 = vmatprep.subr.mxu0 0.0
    %1394 = vmatpush1.msra.mxu0 0.0
    %1395 = vmatprep.subr.mxu0 0.0
    %1396 = vmatpush1.msra.mxu0 0.0
    %1397 = vmatprep.subr.mxu0 0.0
    %1398 = vmatpush1.msra.mxu0 0.0
    %1399 = vmatprep.subr.mxu0 0.0
    %1400 = vmatpush1.msra.mxu0 0.0
    %1401 = vmatprep.subr.mxu0 0.0
    %1402 = vmatpush1.msra.mxu0 0.0
    %1403 = vmatprep.subr.mxu0 0.0
    %1404 = vmatpush1.msra.mxu0 0.0
    %1405 = vmatprep.subr.mxu0 0.0
    %1406 = vmatpush1.msra.mxu0 0.0
    %1407 = vmatprep.subr.mxu0 0.0
    %1408 = vmatpush1.msra.mxu0 0.0
    %1409 = vmatprep.subr.mxu0 0.0
    %1410 = vmatpush1.msra.mxu0 0.0
    %1411 = vmatprep.subr.mxu0 0.0
    %1412 = vmatpush1.msra.mxu0 0.0
    %1413 = vmatprep.subr.mxu0 0.0
    %1414 = vmatpush1.msra.mxu0 0.0
    %1415 = vmatprep.subr.mxu0 0.0
    %1416 = vmatpush1.msra.mxu0 0.0
    %1417 = vmatprep.subr.mxu0 0.0
    %1418 = vmatpush1.msra.mxu0 0.0
    %1419 = vmatprep.subr.mxu0 0.0
    %1420 = vmatpush1.msra.mxu0 0.0
    %1421 = vmatprep.subr.mxu0 0.0
    %1422 = vmatpush1.msra.mxu0 0.0
    %1423 = vmatprep.subr.mxu0 0.0
    %1424 = vmatpush1.msra.mxu0 0.0
    %1425 = vmatprep.subr.mxu0 0.0
    %1426 = vmatpush1.msra.mxu0 0.0
    %1427 = vmatprep.subr.mxu0 0.0
    %1428 = vmatpush1.msra.mxu0 0.0
    %1429 = vmatprep.subr.mxu0 0.0
    %1430 = vmatpush1.msra.mxu0 0.0
    %1431 = vmatprep.subr.mxu0 0.0
    %1432 = vmatpush1.msra.mxu0 0.0
    %1433 = vmatprep.subr.mxu0 0.0
    %1434 = vmatpush1.msra.mxu0 0.0
    %1435 = vmatprep.subr.mxu0 0.0
    %1436 = vmatpush1.msra.mxu0 0.0
    %1437 = vmatprep.subr.mxu0 0.0
    %1438 = vmatpush1.msra.mxu0 0.0
    %1439 = vmatprep.subr.mxu0 0.0
    %1440 = vmatpush1.msra.mxu0 0.0
    %1441 = vmatprep.subr.mxu0 0.0
    %1442 = vmatpush1.msra.mxu0 0.0
    %1443 = vmatprep.mubr.f32.mxu0 0.0
    %1444 = vmatmul.mubr.f32.gmra.mrb[0].mxu0 %v1306
    %v1445 = vpop.f32.mrb[0].mxu0
    %v1446 = vadd.f32 0.0, %v1445
    %v1447 = vpop.f32.mrb[0].mxu0
    %1448 = vdwg.mxu0
    %v1449 = vadd.f32 %v1288, %v1375
    %v1450 = vadd.f32 %v1289, %v1377
    %v1451 = vadd.f32 %v1290, %v1446
    %v1452 = vld [vmem:[%s2] sm:$0xff]
    %1454 = vset.pattern.permute.xlu0 0
    %1455 = vperm.xlu0 %1454, %v1452
    %v1456 = vpop.permute.xlu0 %1455
    %v1458 = vadd.f32 %v1449, %v1456
    %v1459 = vadd.f32 %v1450, %v1456
    %v1460 = vadd.f32 %v1451, %v1456
    %1461 = vst [vmem:[#allocation2] sm:$0xff] %v1458
    %1462 = vst [vmem:[#allocation2 + $0x8] sm:$0xff] %v1459
    %vm1463 = vcmask 261120
    %1464 = vst.msk [vmem:[#allocation2 + $0x10] sm:$0xff] %vm1463, %v1460
    %s1465 = scalar_lea.vmem %s0, 24
    %v1466 = vld [vmem:[%s1465] sm:$0xff]
    %v1467 = vld [vmem:[%s1465 + $0x8] sm:$0xff]
    %v1468 = vld [vmem:[%s1465 + $0x10] sm:$0xff]
    %v1469 = vld [vmem:[%s1] sm:$0xff]
    %v1470 = vld [vmem:[%s19] sm:$0xff]
    %1474 = vrot.lane.b32.xlu0 %v1466, 127
    %v1475 = vpop.permute.xlu0 %1474
    %1476 = vrot.lane.b32.xlu0 %v1467, 127
    %v1477 = vpop.permute.xlu0 %1476
    %1478 = vrot.lane.b32.xlu0 %v1468, 127
    %v1479 = vpop.permute.xlu0 %1478
    %v1480 = vsel %vm30, %v1475, %v1477
    %v1481 = vsel %vm30, %v1477, %v1479
    %v1486 = vsel %vm36, %v1470, 0
    %1488 = vmatprep.subr.mxu0 %v1481
    %1489 = vmatpush1.msra.mxu0 %v1480
    %1490 = vmatprep.subr.mxu0 0.0
    %1491 = vmatpush1.msra.mxu0 0.0
    %1492 = vmatprep.subr.mxu0 0.0
    %1493 = vmatpush1.msra.mxu0 0.0
    %1494 = vmatprep.subr.mxu0 0.0
    %1495 = vmatpush1.msra.mxu0 0.0
    %1496 = vmatprep.subr.mxu0 0.0
    %1497 = vmatpush1.msra.mxu0 0.0
    %1498 = vmatprep.subr.mxu0 0.0
    %1499 = vmatpush1.msra.mxu0 0.0
    %1500 = vmatprep.subr.mxu0 0.0
    %1501 = vmatpush1.msra.mxu0 0.0
    %1502 = vmatprep.subr.mxu0 0.0
    %1503 = vmatpush1.msra.mxu0 0.0
    %1504 = vmatprep.subr.mxu0 0.0
    %1505 = vmatpush1.msra.mxu0 0.0
    %1506 = vmatprep.subr.mxu0 0.0
    %1507 = vmatpush1.msra.mxu0 0.0
    %1508 = vmatprep.subr.mxu0 0.0
    %1509 = vmatpush1.msra.mxu0 0.0
    %1510 = vmatprep.subr.mxu0 0.0
    %1511 = vmatpush1.msra.mxu0 0.0
    %1512 = vmatprep.subr.mxu0 0.0
    %1513 = vmatpush1.msra.mxu0 0.0
    %1514 = vmatprep.subr.mxu0 0.0
    %1515 = vmatpush1.msra.mxu0 0.0
    %1516 = vmatprep.subr.mxu0 0.0
    %1517 = vmatpush1.msra.mxu0 0.0
    %1518 = vmatprep.subr.mxu0 0.0
    %1519 = vmatpush1.msra.mxu0 0.0
    %1520 = vmatprep.subr.mxu0 0.0
    %1521 = vmatpush1.msra.mxu0 0.0
    %1522 = vmatprep.subr.mxu0 0.0
    %1523 = vmatpush1.msra.mxu0 0.0
    %1524 = vmatprep.subr.mxu0 0.0
    %1525 = vmatpush1.msra.mxu0 0.0
    %1526 = vmatprep.subr.mxu0 0.0
    %1527 = vmatpush1.msra.mxu0 0.0
    %1528 = vmatprep.subr.mxu0 0.0
    %1529 = vmatpush1.msra.mxu0 0.0
    %1530 = vmatprep.subr.mxu0 0.0
    %1531 = vmatpush1.msra.mxu0 0.0
    %1532 = vmatprep.subr.mxu0 0.0
    %1533 = vmatpush1.msra.mxu0 0.0
    %1534 = vmatprep.subr.mxu0 0.0
    %1535 = vmatpush1.msra.mxu0 0.0
    %1536 = vmatprep.subr.mxu0 0.0
    %1537 = vmatpush1.msra.mxu0 0.0
    %1538 = vmatprep.subr.mxu0 0.0
    %1539 = vmatpush1.msra.mxu0 0.0
    %1540 = vmatprep.subr.mxu0 0.0
    %1541 = vmatpush1.msra.mxu0 0.0
    %1542 = vmatprep.subr.mxu0 0.0
    %1543 = vmatpush1.msra.mxu0 0.0
    %1544 = vmatprep.subr.mxu0 0.0
    %1545 = vmatpush1.msra.mxu0 0.0
    %1546 = vmatprep.subr.mxu0 0.0
    %1547 = vmatpush1.msra.mxu0 0.0
    %1548 = vmatprep.subr.mxu0 0.0
    %1549 = vmatpush1.msra.mxu0 0.0
    %1550 = vmatprep.subr.mxu0 0.0
    %1551 = vmatpush1.msra.mxu0 0.0
    %1552 = vmatprep.mubr.f32.mxu0 0.0
    %1553 = vmatmul.mubr.f32.gmra.mrb[0].mxu0 %v1486
    %v1554 = vpop.f32.mrb[0].mxu0
    %v1555 = vadd.f32 0.0, %v1554
    %v1556 = vpop.f32.mrb[0].mxu0
    %v1557 = vadd.f32 0.0, %v1556
    %1558 = vdwg.mxu0
    %1559 = vmatprep.subr.mxu0 0.0
    %1560 = vmatpush1.msra.mxu0 %v1479
    %1561 = vmatprep.subr.mxu0 0.0
    %1562 = vmatpush1.msra.mxu0 0.0
    %1563 = vmatprep.subr.mxu0 0.0
    %1564 = vmatpush1.msra.mxu0 0.0
    %1565 = vmatprep.subr.mxu0 0.0
    %1566 = vmatpush1.msra.mxu0 0.0
    %1567 = vmatprep.subr.mxu0 0.0
    %1568 = vmatpush1.msra.mxu0 0.0
    %1569 = vmatprep.subr.mxu0 0.0
    %1570 = vmatpush1.msra.mxu0 0.0
    %1571 = vmatprep.subr.mxu0 0.0
    %1572 = vmatpush1.msra.mxu0 0.0
    %1573 = vmatprep.subr.mxu0 0.0
    %1574 = vmatpush1.msra.mxu0 0.0
    %1575 = vmatprep.subr.mxu0 0.0
    %1576 = vmatpush1.msra.mxu0 0.0
    %1577 = vmatprep.subr.mxu0 0.0
    %1578 = vmatpush1.msra.mxu0 0.0
    %1579 = vmatprep.subr.mxu0 0.0
    %1580 = vmatpush1.msra.mxu0 0.0
    %1581 = vmatprep.subr.mxu0 0.0
    %1582 = vmatpush1.msra.mxu0 0.0
    %1583 = vmatprep.subr.mxu0 0.0
    %1584 = vmatpush1.msra.mxu0 0.0
    %1585 = vmatprep.subr.mxu0 0.0
    %1586 = vmatpush1.msra.mxu0 0.0
    %1587 = vmatprep.subr.mxu0 0.0
    %1588 = vmatpush1.msra.mxu0 0.0
    %1589 = vmatprep.subr.mxu0 0.0
    %1590 = vmatpush1.msra.mxu0 0.0
    %1591 = vmatprep.subr.mxu0 0.0
    %1592 = vmatpush1.msra.mxu0 0.0
    %1593 = vmatprep.subr.mxu0 0.0
    %1594 = vmatpush1.msra.mxu0 0.0
    %1595 = vmatprep.subr.mxu0 0.0
    %1596 = vmatpush1.msra.mxu0 0.0
    %1597 = vmatprep.subr.mxu0 0.0
    %1598 = vmatpush1.msra.mxu0 0.0
    %1599 = vmatprep.subr.mxu0 0.0
    %1600 = vmatpush1.msra.mxu0 0.0
    %1601 = vmatprep.subr.mxu0 0.0
    %1602 = vmatpush1.msra.mxu0 0.0
    %1603 = vmatprep.subr.mxu0 0.0
    %1604 = vmatpush1.msra.mxu0 0.0
    %1605 = vmatprep.subr.mxu0 0.0
    %1606 = vmatpush1.msra.mxu0 0.0
    %1607 = vmatprep.subr.mxu0 0.0
    %1608 = vmatpush1.msra.mxu0 0.0
    %1609 = vmatprep.subr.mxu0 0.0
    %1610 = vmatpush1.msra.mxu0 0.0
    %1611 = vmatprep.subr.mxu0 0.0
    %1612 = vmatpush1.msra.mxu0 0.0
    %1613 = vmatprep.subr.mxu0 0.0
    %1614 = vmatpush1.msra.mxu0 0.0
    %1615 = vmatprep.subr.mxu0 0.0
    %1616 = vmatpush1.msra.mxu0 0.0
    %1617 = vmatprep.subr.mxu0 0.0
    %1618 = vmatpush1.msra.mxu0 0.0
    %1619 = vmatprep.subr.mxu0 0.0
    %1620 = vmatpush1.msra.mxu0 0.0
    %1621 = vmatprep.subr.mxu0 0.0
    %1622 = vmatpush1.msra.mxu0 0.0
    %1623 = vmatprep.mubr.f32.mxu0 0.0
    %1624 = vmatmul.mubr.f32.gmra.mrb[0].mxu0 %v1486
    %v1625 = vpop.f32.mrb[0].mxu0
    %v1626 = vadd.f32 0.0, %v1625
    %v1627 = vpop.f32.mrb[0].mxu0
    %1628 = vdwg.mxu0
    %v1630 = vsel %vm36, %v1469, 0
    %1632 = vmatprep.subr.mxu0 %v1467
    %1633 = vmatpush1.msra.mxu0 %v1466
    %1634 = vmatprep.subr.mxu0 0.0
    %1635 = vmatpush1.msra.mxu0 0.0
    %1636 = vmatprep.subr.mxu0 0.0
    %1637 = vmatpush1.msra.mxu0 0.0
    %1638 = vmatprep.subr.mxu0 0.0
    %1639 = vmatpush1.msra.mxu0 0.0
    %1640 = vmatprep.subr.mxu0 0.0
    %1641 = vmatpush1.msra.mxu0 0.0
    %1642 = vmatprep.subr.mxu0 0.0
    %1643 = vmatpush1.msra.mxu0 0.0
    %1644 = vmatprep.subr.mxu0 0.0
    %1645 = vmatpush1.msra.mxu0 0.0
    %1646 = vmatprep.subr.mxu0 0.0
    %1647 = vmatpush1.msra.mxu0 0.0
    %1648 = vmatprep.subr.mxu0 0.0
    %1649 = vmatpush1.msra.mxu0 0.0
    %1650 = vmatprep.subr.mxu0 0.0
    %1651 = vmatpush1.msra.mxu0 0.0
    %1652 = vmatprep.subr.mxu0 0.0
    %1653 = vmatpush1.msra.mxu0 0.0
    %1654 = vmatprep.subr.mxu0 0.0
    %1655 = vmatpush1.msra.mxu0 0.0
    %1656 = vmatprep.subr.mxu0 0.0
    %1657 = vmatpush1.msra.mxu0 0.0
    %1658 = vmatprep.subr.mxu0 0.0
    %1659 = vmatpush1.msra.mxu0 0.0
    %1660 = vmatprep.subr.mxu0 0.0
    %1661 = vmatpush1.msra.mxu0 0.0
    %1662 = vmatprep.subr.mxu0 0.0
    %1663 = vmatpush1.msra.mxu0 0.0
    %1664 = vmatprep.subr.mxu0 0.0
    %1665 = vmatpush1.msra.mxu0 0.0
    %1666 = vmatprep.subr.mxu0 0.0
    %1667 = vmatpush1.msra.mxu0 0.0
    %1668 = vmatprep.subr.mxu0 0.0
    %1669 = vmatpush1.msra.mxu0 0.0
    %1670 = vmatprep.subr.mxu0 0.0
    %1671 = vmatpush1.msra.mxu0 0.0
    %1672 = vmatprep.subr.mxu0 0.0
    %1673 = vmatpush1.msra.mxu0 0.0
    %1674 = vmatprep.subr.mxu0 0.0
    %1675 = vmatpush1.msra.mxu0 0.0
    %1676 = vmatprep.subr.mxu0 0.0
    %1677 = vmatpush1.msra.mxu0 0.0
    %1678 = vmatprep.subr.mxu0 0.0
    %1679 = vmatpush1.msra.mxu0 0.0
    %1680 = vmatprep.subr.mxu0 0.0
    %1681 = vmatpush1.msra.mxu0 0.0
    %1682 = vmatprep.subr.mxu0 0.0
    %1683 = vmatpush1.msra.mxu0 0.0
    %1684 = vmatprep.subr.mxu0 0.0
    %1685 = vmatpush1.msra.mxu0 0.0
    %1686 = vmatprep.subr.mxu0 0.0
    %1687 = vmatpush1.msra.mxu0 0.0
    %1688 = vmatprep.subr.mxu0 0.0
    %1689 = vmatpush1.msra.mxu0 0.0
    %1690 = vmatprep.subr.mxu0 0.0
    %1691 = vmatpush1.msra.mxu0 0.0
    %1692 = vmatprep.subr.mxu0 0.0
    %1693 = vmatpush1.msra.mxu0 0.0
    %1694 = vmatprep.subr.mxu0 0.0
    %1695 = vmatpush1.msra.mxu0 0.0
    %1696 = vmatprep.mubr.f32.mxu0 0.0
    %1697 = vmatmul.mubr.f32.gmra.mrb[0].mxu0 %v1630
    %v1698 = vpop.f32.mrb[0].mxu0
    %v1699 = vadd.f32 %v1555, %v1698
    %v1700 = vpop.f32.mrb[0].mxu0
    %v1701 = vadd.f32 %v1557, %v1700
    %1702 = vdwg.mxu0
    %1703 = vmatprep.subr.mxu0 0.0
    %1704 = vmatpush1.msra.mxu0 %v1468
    %1705 = vmatprep.subr.mxu0 0.0
    %1706 = vmatpush1.msra.mxu0 0.0
    %1707 = vmatprep.subr.mxu0 0.0
    %1708 = vmatpush1.msra.mxu0 0.0
    %1709 = vmatprep.subr.mxu0 0.0
    %1710 = vmatpush1.msra.mxu0 0.0
    %1711 = vmatprep.subr.mxu0 0.0
    %1712 = vmatpush1.msra.mxu0 0.0
    %1713 = vmatprep.subr.mxu0 0.0
    %1714 = vmatpush1.msra.mxu0 0.0
    %1715 = vmatprep.subr.mxu0 0.0
    %1716 = vmatpush1.msra.mxu0 0.0
    %1717 = vmatprep.subr.mxu0 0.0
    %1718 = vmatpush1.msra.mxu0 0.0
    %1719 = vmatprep.subr.mxu0 0.0
    %1720 = vmatpush1.msra.mxu0 0.0
    %1721 = vmatprep.subr.mxu0 0.0
    %1722 = vmatpush1.msra.mxu0 0.0
    %1723 = vmatprep.subr.mxu0 0.0
    %1724 = vmatpush1.msra.mxu0 0.0
    %1725 = vmatprep.subr.mxu0 0.0
    %1726 = vmatpush1.msra.mxu0 0.0
    %1727 = vmatprep.subr.mxu0 0.0
    %1728 = vmatpush1.msra.mxu0 0.0
    %1729 = vmatprep.subr.mxu0 0.0
    %1730 = vmatpush1.msra.mxu0 0.0
    %1731 = vmatprep.subr.mxu0 0.0
    %1732 = vmatpush1.msra.mxu0 0.0
    %1733 = vmatprep.subr.mxu0 0.0
    %1734 = vmatpush1.msra.mxu0 0.0
    %1735 = vmatprep.subr.mxu0 0.0
    %1736 = vmatpush1.msra.mxu0 0.0
    %1737 = vmatprep.subr.mxu0 0.0
    %1738 = vmatpush1.msra.mxu0 0.0
    %1739 = vmatprep.subr.mxu0 0.0
    %1740 = vmatpush1.msra.mxu0 0.0
    %1741 = vmatprep.subr.mxu0 0.0
    %1742 = vmatpush1.msra.mxu0 0.0
    %1743 = vmatprep.subr.mxu0 0.0
    %1744 = vmatpush1.msra.mxu0 0.0
    %1745 = vmatprep.subr.mxu0 0.0
    %1746 = vmatpush1.msra.mxu0 0.0
    %1747 = vmatprep.subr.mxu0 0.0
    %1748 = vmatpush1.msra.mxu0 0.0
    %1749 = vmatprep.subr.mxu0 0.0
    %1750 = vmatpush1.msra.mxu0 0.0
    %1751 = vmatprep.subr.mxu0 0.0
    %1752 = vmatpush1.msra.mxu0 0.0
    %1753 = vmatprep.subr.mxu0 0.0
    %1754 = vmatpush1.msra.mxu0 0.0
    %1755 = vmatprep.subr.mxu0 0.0
    %1756 = vmatpush1.msra.mxu0 0.0
    %1757 = vmatprep.subr.mxu0 0.0
    %1758 = vmatpush1.msra.mxu0 0.0
    %1759 = vmatprep.subr.mxu0 0.0
    %1760 = vmatpush1.msra.mxu0 0.0
    %1761 = vmatprep.subr.mxu0 0.0
    %1762 = vmatpush1.msra.mxu0 0.0
    %1763 = vmatprep.subr.mxu0 0.0
    %1764 = vmatpush1.msra.mxu0 0.0
    %1765 = vmatprep.subr.mxu0 0.0
    %1766 = vmatpush1.msra.mxu0 0.0
    %1767 = vmatprep.mubr.f32.mxu0 0.0
    %1768 = vmatmul.mubr.f32.gmra.mrb[0].mxu0 %v1630
    %v1769 = vpop.f32.mrb[0].mxu0
    %v1770 = vadd.f32 %v1626, %v1769
    %v1771 = vpop.f32.mrb[0].mxu0
    %1772 = vdwg.mxu0
    %v1773 = vld [vmem:[%s325] sm:$0xff]
    %1774 = vrot.lane.b32.xlu0 %v1466, 126
    %v1775 = vpop.permute.xlu0 %1774
    %1776 = vrot.lane.b32.xlu0 %v1467, 126
    %v1777 = vpop.permute.xlu0 %1776
    %1778 = vrot.lane.b32.xlu0 %v1468, 126
    %v1779 = vpop.permute.xlu0 %1778
    %v1780 = vsel %vm333, %v1775, %v1777
    %v1781 = vsel %vm333, %v1777, %v1779
    %v1786 = vsel %vm36, %v1773, 0
    %1788 = vmatprep.subr.mxu0 %v1781
    %1789 = vmatpush1.msra.mxu0 %v1780
    %1790 = vmatprep.subr.mxu0 0.0
    %1791 = vmatpush1.msra.mxu0 0.0
    %1792 = vmatprep.subr.mxu0 0.0
    %1793 = vmatpush1.msra.mxu0 0.0
    %1794 = vmatprep.subr.mxu0 0.0
    %1795 = vmatpush1.msra.mxu0 0.0
    %1796 = vmatprep.subr.mxu0 0.0
    %1797 = vmatpush1.msra.mxu0 0.0
    %1798 = vmatprep.subr.mxu0 0.0
    %1799 = vmatpush1.msra.mxu0 0.0
    %1800 = vmatprep.subr.mxu0 0.0
    %1801 = vmatpush1.msra.mxu0 0.0
    %1802 = vmatprep.subr.mxu0 0.0
    %1803 = vmatpush1.msra.mxu0 0.0
    %1804 = vmatprep.subr.mxu0 0.0
    %1805 = vmatpush1.msra.mxu0 0.0
    %1806 = vmatprep.subr.mxu0 0.0
    %1807 = vmatpush1.msra.mxu0 0.0
    %1808 = vmatprep.subr.mxu0 0.0
    %1809 = vmatpush1.msra.mxu0 0.0
    %1810 = vmatprep.subr.mxu0 0.0
    %1811 = vmatpush1.msra.mxu0 0.0
    %1812 = vmatprep.subr.mxu0 0.0
    %1813 = vmatpush1.msra.mxu0 0.0
    %1814 = vmatprep.subr.mxu0 0.0
    %1815 = vmatpush1.msra.mxu0 0.0
    %1816 = vmatprep.subr.mxu0 0.0
    %1817 = vmatpush1.msra.mxu0 0.0
    %1818 = vmatprep.subr.mxu0 0.0
    %1819 = vmatpush1.msra.mxu0 0.0
    %1820 = vmatprep.subr.mxu0 0.0
    %1821 = vmatpush1.msra.mxu0 0.0
    %1822 = vmatprep.subr.mxu0 0.0
    %1823 = vmatpush1.msra.mxu0 0.0
    %1824 = vmatprep.subr.mxu0 0.0
    %1825 = vmatpush1.msra.mxu0 0.0
    %1826 = vmatprep.subr.mxu0 0.0
    %1827 = vmatpush1.msra.mxu0 0.0
    %1828 = vmatprep.subr.mxu0 0.0
    %1829 = vmatpush1.msra.mxu0 0.0
    %1830 = vmatprep.subr.mxu0 0.0
    %1831 = vmatpush1.msra.mxu0 0.0
    %1832 = vmatprep.subr.mxu0 0.0
    %1833 = vmatpush1.msra.mxu0 0.0
    %1834 = vmatprep.subr.mxu0 0.0
    %1835 = vmatpush1.msra.mxu0 0.0
    %1836 = vmatprep.subr.mxu0 0.0
    %1837 = vmatpush1.msra.mxu0 0.0
    %1838 = vmatprep.subr.mxu0 0.0
    %1839 = vmatpush1.msra.mxu0 0.0
    %1840 = vmatprep.subr.mxu0 0.0
    %1841 = vmatpush1.msra.mxu0 0.0
    %1842 = vmatprep.subr.mxu0 0.0
    %1843 = vmatpush1.msra.mxu0 0.0
    %1844 = vmatprep.subr.mxu0 0.0
    %1845 = vmatpush1.msra.mxu0 0.0
    %1846 = vmatprep.subr.mxu0 0.0
    %1847 = vmatpush1.msra.mxu0 0.0
    %1848 = vmatprep.subr.mxu0 0.0
    %1849 = vmatpush1.msra.mxu0 0.0
    %1850 = vmatprep.subr.mxu0 0.0
    %1851 = vmatpush1.msra.mxu0 0.0
    %1852 = vmatprep.mubr.f32.mxu0 0.0
    %1853 = vmatmul.mubr.f32.gmra.mrb[0].mxu0 %v1786
    %v1854 = vpop.f32.mrb[0].mxu0
    %v1855 = vadd.f32 0.0, %v1854
    %v1856 = vpop.f32.mrb[0].mxu0
    %v1857 = vadd.f32 0.0, %v1856
    %1858 = vdwg.mxu0
    %1859 = vmatprep.subr.mxu0 0.0
    %1860 = vmatpush1.msra.mxu0 %v1779
    %1861 = vmatprep.subr.mxu0 0.0
    %1862 = vmatpush1.msra.mxu0 0.0
    %1863 = vmatprep.subr.mxu0 0.0
    %1864 = vmatpush1.msra.mxu0 0.0
    %1865 = vmatprep.subr.mxu0 0.0
    %1866 = vmatpush1.msra.mxu0 0.0
    %1867 = vmatprep.subr.mxu0 0.0
    %1868 = vmatpush1.msra.mxu0 0.0
    %1869 = vmatprep.subr.mxu0 0.0
    %1870 = vmatpush1.msra.mxu0 0.0
    %1871 = vmatprep.subr.mxu0 0.0
    %1872 = vmatpush1.msra.mxu0 0.0
    %1873 = vmatprep.subr.mxu0 0.0
    %1874 = vmatpush1.msra.mxu0 0.0
    %1875 = vmatprep.subr.mxu0 0.0
    %1876 = vmatpush1.msra.mxu0 0.0
    %1877 = vmatprep.subr.mxu0 0.0
    %1878 = vmatpush1.msra.mxu0 0.0
    %1879 = vmatprep.subr.mxu0 0.0
    %1880 = vmatpush1.msra.mxu0 0.0
    %1881 = vmatprep.subr.mxu0 0.0
    %1882 = vmatpush1.msra.mxu0 0.0
    %1883 = vmatprep.subr.mxu0 0.0
    %1884 = vmatpush1.msra.mxu0 0.0
    %1885 = vmatprep.subr.mxu0 0.0
    %1886 = vmatpush1.msra.mxu0 0.0
    %1887 = vmatprep.subr.mxu0 0.0
    %1888 = vmatpush1.msra.mxu0 0.0
    %1889 = vmatprep.subr.mxu0 0.0
    %1890 = vmatpush1.msra.mxu0 0.0
    %1891 = vmatprep.subr.mxu0 0.0
    %1892 = vmatpush1.msra.mxu0 0.0
    %1893 = vmatprep.subr.mxu0 0.0
    %1894 = vmatpush1.msra.mxu0 0.0
    %1895 = vmatprep.subr.mxu0 0.0
    %1896 = vmatpush1.msra.mxu0 0.0
    %1897 = vmatprep.subr.mxu0 0.0
    %1898 = vmatpush1.msra.mxu0 0.0
    %1899 = vmatprep.subr.mxu0 0.0
    %1900 = vmatpush1.msra.mxu0 0.0
    %1901 = vmatprep.subr.mxu0 0.0
    %1902 = vmatpush1.msra.mxu0 0.0
    %1903 = vmatprep.subr.mxu0 0.0
    %1904 = vmatpush1.msra.mxu0 0.0
    %1905 = vmatprep.subr.mxu0 0.0
    %1906 = vmatpush1.msra.mxu0 0.0
    %1907 = vmatprep.subr.mxu0 0.0
    %1908 = vmatpush1.msra.mxu0 0.0
    %1909 = vmatprep.subr.mxu0 0.0
    %1910 = vmatpush1.msra.mxu0 0.0
    %1911 = vmatprep.subr.mxu0 0.0
    %1912 = vmatpush1.msra.mxu0 0.0
    %1913 = vmatprep.subr.mxu0 0.0
    %1914 = vmatpush1.msra.mxu0 0.0
    %1915 = vmatprep.subr.mxu0 0.0
    %1916 = vmatpush1.msra.mxu0 0.0
    %1917 = vmatprep.subr.mxu0 0.0
    %1918 = vmatpush1.msra.mxu0 0.0
    %1919 = vmatprep.subr.mxu0 0.0
    %1920 = vmatpush1.msra.mxu0 0.0
    %1921 = vmatprep.subr.mxu0 0.0
    %1922 = vmatpush1.msra.mxu0 0.0
    %1923 = vmatprep.mubr.f32.mxu0 0.0
    %1924 = vmatmul.mubr.f32.gmra.mrb[0].mxu0 %v1786
    %v1925 = vpop.f32.mrb[0].mxu0
    %v1926 = vadd.f32 0.0, %v1925
    %v1927 = vpop.f32.mrb[0].mxu0
    %1928 = vdwg.mxu0
    %v1929 = vadd.f32 %v1699, %v1855
    %v1930 = vadd.f32 %v1701, %v1857
    %v1931 = vadd.f32 %v1770, %v1926
    %v1932 = vld [vmem:[%s486] sm:$0xff]
    %1933 = vrot.lane.b32.xlu0 %v1466, 110
    %v1934 = vpop.permute.xlu0 %1933
    %1935 = vrot.lane.b32.xlu0 %v1467, 110
    %v1936 = vpop.permute.xlu0 %1935
    %1937 = vrot.lane.b32.xlu0 %v1468, 110
    %v1938 = vpop.permute.xlu0 %1937
    %v1939 = vsel %vm494, %v1934, %v1936
    %v1940 = vsel %vm494, %v1936, %v1938
    %v1945 = vsel %vm36, %v1932, 0
    %1947 = vmatprep.subr.mxu0 %v1940
    %1948 = vmatpush1.msra.mxu0 %v1939
    %1949 = vmatprep.subr.mxu0 0.0
    %1950 = vmatpush1.msra.mxu0 0.0
    %1951 = vmatprep.subr.mxu0 0.0
    %1952 = vmatpush1.msra.mxu0 0.0
    %1953 = vmatprep.subr.mxu0 0.0
    %1954 = vmatpush1.msra.mxu0 0.0
    %1955 = vmatprep.subr.mxu0 0.0
    %1956 = vmatpush1.msra.mxu0 0.0
    %1957 = vmatprep.subr.mxu0 0.0
    %1958 = vmatpush1.msra.mxu0 0.0
    %1959 = vmatprep.subr.mxu0 0.0
    %1960 = vmatpush1.msra.mxu0 0.0
    %1961 = vmatprep.subr.mxu0 0.0
    %1962 = vmatpush1.msra.mxu0 0.0
    %1963 = vmatprep.subr.mxu0 0.0
    %1964 = vmatpush1.msra.mxu0 0.0
    %1965 = vmatprep.subr.mxu0 0.0
    %1966 = vmatpush1.msra.mxu0 0.0
    %1967 = vmatprep.subr.mxu0 0.0
    %1968 = vmatpush1.msra.mxu0 0.0
    %1969 = vmatprep.subr.mxu0 0.0
    %1970 = vmatpush1.msra.mxu0 0.0
    %1971 = vmatprep.subr.mxu0 0.0
    %1972 = vmatpush1.msra.mxu0 0.0
    %1973 = vmatprep.subr.mxu0 0.0
    %1974 = vmatpush1.msra.mxu0 0.0
    %1975 = vmatprep.subr.mxu0 0.0
    %1976 = vmatpush1.msra.mxu0 0.0
    %1977 = vmatprep.subr.mxu0 0.0
    %1978 = vmatpush1.msra.mxu0 0.0
    %1979 = vmatprep.subr.mxu0 0.0
    %1980 = vmatpush1.msra.mxu0 0.0
    %1981 = vmatprep.subr.mxu0 0.0
    %1982 = vmatpush1.msra.mxu0 0.0
    %1983 = vmatprep.subr.mxu0 0.0
    %1984 = vmatpush1.msra.mxu0 0.0
    %1985 = vmatprep.subr.mxu0 0.0
    %1986 = vmatpush1.msra.mxu0 0.0
    %1987 = vmatprep.subr.mxu0 0.0
    %1988 = vmatpush1.msra.mxu0 0.0
    %1989 = vmatprep.subr.mxu0 0.0
    %1990 = vmatpush1.msra.mxu0 0.0
    %1991 = vmatprep.subr.mxu0 0.0
    %1992 = vmatpush1.msra.mxu0 0.0
    %1993 = vmatprep.subr.mxu0 0.0
    %1994 = vmatpush1.msra.mxu0 0.0
    %1995 = vmatprep.subr.mxu0 0.0
    %1996 = vmatpush1.msra.mxu0 0.0
    %1997 = vmatprep.subr.mxu0 0.0
    %1998 = vmatpush1.msra.mxu0 0.0
    %1999 = vmatprep.subr.mxu0 0.0
    %2000 = vmatpush1.msra.mxu0 0.0
    %2001 = vmatprep.subr.mxu0 0.0
    %2002 = vmatpush1.msra.mxu0 0.0
    %2003 = vmatprep.subr.mxu0 0.0
    %2004 = vmatpush1.msra.mxu0 0.0
    %2005 = vmatprep.subr.mxu0 0.0
    %2006 = vmatpush1.msra.mxu0 0.0
    %2007 = vmatprep.subr.mxu0 0.0
    %2008 = vmatpush1.msra.mxu0 0.0
    %2009 = vmatprep.subr.mxu0 0.0
    %2010 = vmatpush1.msra.mxu0 0.0
    %2011 = vmatprep.mubr.f32.mxu0 0.0
    %2012 = vmatmul.mubr.f32.gmra.mrb[0].mxu0 %v1945
    %v2013 = vpop.f32.mrb[0].mxu0
    %v2014 = vadd.f32 0.0, %v2013
    %v2015 = vpop.f32.mrb[0].mxu0
    %v2016 = vadd.f32 0.0, %v2015
    %2017 = vdwg.mxu0
    %2018 = vmatprep.subr.mxu0 0.0
    %2019 = vmatpush1.msra.mxu0 %v1938
    %2020 = vmatprep.subr.mxu0 0.0
    %2021 = vmatpush1.msra.mxu0 0.0
    %2022 = vmatprep.subr.mxu0 0.0
    %2023 = vmatpush1.msra.mxu0 0.0
    %2024 = vmatprep.subr.mxu0 0.0
    %2025 = vmatpush1.msra.mxu0 0.0
    %2026 = vmatprep.subr.mxu0 0.0
    %2027 = vmatpush1.msra.mxu0 0.0
    %2028 = vmatprep.subr.mxu0 0.0
    %2029 = vmatpush1.msra.mxu0 0.0
    %2030 = vmatprep.subr.mxu0 0.0
    %2031 = vmatpush1.msra.mxu0 0.0
    %2032 = vmatprep.subr.mxu0 0.0
    %2033 = vmatpush1.msra.mxu0 0.0
    %2034 = vmatprep.subr.mxu0 0.0
    %2035 = vmatpush1.msra.mxu0 0.0
    %2036 = vmatprep.subr.mxu0 0.0
    %2037 = vmatpush1.msra.mxu0 0.0
    %2038 = vmatprep.subr.mxu0 0.0
    %2039 = vmatpush1.msra.mxu0 0.0
    %2040 = vmatprep.subr.mxu0 0.0
    %2041 = vmatpush1.msra.mxu0 0.0
    %2042 = vmatprep.subr.mxu0 0.0
    %2043 = vmatpush1.msra.mxu0 0.0
    %2044 = vmatprep.subr.mxu0 0.0
    %2045 = vmatpush1.msra.mxu0 0.0
    %2046 = vmatprep.subr.mxu0 0.0
    %2047 = vmatpush1.msra.mxu0 0.0
    %2048 = vmatprep.subr.mxu0 0.0
    %2049 = vmatpush1.msra.mxu0 0.0
    %2050 = vmatprep.subr.mxu0 0.0
    %2051 = vmatpush1.msra.mxu0 0.0
    %2052 = vmatprep.subr.mxu0 0.0
    %2053 = vmatpush1.msra.mxu0 0.0
    %2054 = vmatprep.subr.mxu0 0.0
    %2055 = vmatpush1.msra.mxu0 0.0
    %2056 = vmatprep.subr.mxu0 0.0
    %2057 = vmatpush1.msra.mxu0 0.0
    %2058 = vmatprep.subr.mxu0 0.0
    %2059 = vmatpush1.msra.mxu0 0.0
    %2060 = vmatprep.subr.mxu0 0.0
    %2061 = vmatpush1.msra.mxu0 0.0
    %2062 = vmatprep.subr.mxu0 0.0
    %2063 = vmatpush1.msra.mxu0 0.0
    %2064 = vmatprep.subr.mxu0 0.0
    %2065 = vmatpush1.msra.mxu0 0.0
    %2066 = vmatprep.subr.mxu0 0.0
    %2067 = vmatpush1.msra.mxu0 0.0
    %2068 = vmatprep.subr.mxu0 0.0
    %2069 = vmatpush1.msra.mxu0 0.0
    %2070 = vmatprep.subr.mxu0 0.0
    %2071 = vmatpush1.msra.mxu0 0.0
    %2072 = vmatprep.subr.mxu0 0.0
    %2073 = vmatpush1.msra.mxu0 0.0
    %2074 = vmatprep.subr.mxu0 0.0
    %2075 = vmatpush1.msra.mxu0 0.0
    %2076 = vmatprep.subr.mxu0 0.0
    %2077 = vmatpush1.msra.mxu0 0.0
    %2078 = vmatprep.subr.mxu0 0.0
    %2079 = vmatpush1.msra.mxu0 0.0
    %2080 = vmatprep.subr.mxu0 0.0
    %2081 = vmatpush1.msra.mxu0 0.0
    %2082 = vmatprep.mubr.f32.mxu0 0.0
    %2083 = vmatmul.mubr.f32.gmra.mrb[0].mxu0 %v1945
    %v2084 = vpop.f32.mrb[0].mxu0
    %v2085 = vadd.f32 0.0, %v2084
    %v2086 = vpop.f32.mrb[0].mxu0
    %2087 = vdwg.mxu0
    %v2088 = vadd.f32 %v1929, %v2014
    %v2089 = vadd.f32 %v1930, %v2016
    %v2090 = vadd.f32 %v1931, %v2085
    %v2091 = vld [vmem:[%s647] sm:$0xff]
    %2092 = vrot.lane.b32.xlu0 %v1466, 109
    %v2093 = vpop.permute.xlu0 %2092
    %2094 = vrot.lane.b32.xlu0 %v1467, 109
    %v2095 = vpop.permute.xlu0 %2094
    %2096 = vrot.lane.b32.xlu0 %v1468, 109
    %v2097 = vpop.permute.xlu0 %2096
    %v2098 = vsel %vm655, %v2093, %v2095
    %v2099 = vsel %vm655, %v2095, %v2097
    %v2104 = vsel %vm36, %v2091, 0
    %2106 = vmatprep.subr.mxu0 %v2099
    %2107 = vmatpush1.msra.mxu0 %v2098
    %2108 = vmatprep.subr.mxu0 0.0
    %2109 = vmatpush1.msra.mxu0 0.0
    %2110 = vmatprep.subr.mxu0 0.0
    %2111 = vmatpush1.msra.mxu0 0.0
    %2112 = vmatprep.subr.mxu0 0.0
    %2113 = vmatpush1.msra.mxu0 0.0
    %2114 = vmatprep.subr.mxu0 0.0
    %2115 = vmatpush1.msra.mxu0 0.0
    %2116 = vmatprep.subr.mxu0 0.0
    %2117 = vmatpush1.msra.mxu0 0.0
    %2118 = vmatprep.subr.mxu0 0.0
    %2119 = vmatpush1.msra.mxu0 0.0
    %2120 = vmatprep.subr.mxu0 0.0
    %2121 = vmatpush1.msra.mxu0 0.0
    %2122 = vmatprep.subr.mxu0 0.0
    %2123 = vmatpush1.msra.mxu0 0.0
    %2124 = vmatprep.subr.mxu0 0.0
    %2125 = vmatpush1.msra.mxu0 0.0
    %2126 = vmatprep.subr.mxu0 0.0
    %2127 = vmatpush1.msra.mxu0 0.0
    %2128 = vmatprep.subr.mxu0 0.0
    %2129 = vmatpush1.msra.mxu0 0.0
    %2130 = vmatprep.subr.mxu0 0.0
    %2131 = vmatpush1.msra.mxu0 0.0
    %2132 = vmatprep.subr.mxu0 0.0
    %2133 = vmatpush1.msra.mxu0 0.0
    %2134 = vmatprep.subr.mxu0 0.0
    %2135 = vmatpush1.msra.mxu0 0.0
    %2136 = vmatprep.subr.mxu0 0.0
    %2137 = vmatpush1.msra.mxu0 0.0
    %2138 = vmatprep.subr.mxu0 0.0
    %2139 = vmatpush1.msra.mxu0 0.0
    %2140 = vmatprep.subr.mxu0 0.0
    %2141 = vmatpush1.msra.mxu0 0.0
    %2142 = vmatprep.subr.mxu0 0.0
    %2143 = vmatpush1.msra.mxu0 0.0
    %2144 = vmatprep.subr.mxu0 0.0
    %2145 = vmatpush1.msra.mxu0 0.0
    %2146 = vmatprep.subr.mxu0 0.0
    %2147 = vmatpush1.msra.mxu0 0.0
    %2148 = vmatprep.subr.mxu0 0.0
    %2149 = vmatpush1.msra.mxu0 0.0
    %2150 = vmatprep.subr.mxu0 0.0
    %2151 = vmatpush1.msra.mxu0 0.0
    %2152 = vmatprep.subr.mxu0 0.0
    %2153 = vmatpush1.msra.mxu0 0.0
    %2154 = vmatprep.subr.mxu0 0.0
    %2155 = vmatpush1.msra.mxu0 0.0
    %2156 = vmatprep.subr.mxu0 0.0
    %2157 = vmatpush1.msra.mxu0 0.0
    %2158 = vmatprep.subr.mxu0 0.0
    %2159 = vmatpush1.msra.mxu0 0.0
    %2160 = vmatprep.subr.mxu0 0.0
    %2161 = vmatpush1.msra.mxu0 0.0
    %2162 = vmatprep.subr.mxu0 0.0
    %2163 = vmatpush1.msra.mxu0 0.0
    %2164 = vmatprep.subr.mxu0 0.0
    %2165 = vmatpush1.msra.mxu0 0.0
    %2166 = vmatprep.subr.mxu0 0.0
    %2167 = vmatpush1.msra.mxu0 0.0
    %2168 = vmatprep.subr.mxu0 0.0
    %2169 = vmatpush1.msra.mxu0 0.0
    %2170 = vmatprep.mubr.f32.mxu0 0.0
    %2171 = vmatmul.mubr.f32.gmra.mrb[0].mxu0 %v2104
    %v2172 = vpop.f32.mrb[0].mxu0
    %v2173 = vadd.f32 0.0, %v2172
    %v2174 = vpop.f32.mrb[0].mxu0
    %v2175 = vadd.f32 0.0, %v2174
    %2176 = vdwg.mxu0
    %2177 = vmatprep.subr.mxu0 0.0
    %2178 = vmatpush1.msra.mxu0 %v2097
    %2179 = vmatprep.subr.mxu0 0.0
    %2180 = vmatpush1.msra.mxu0 0.0
    %2181 = vmatprep.subr.mxu0 0.0
    %2182 = vmatpush1.msra.mxu0 0.0
    %2183 = vmatprep.subr.mxu0 0.0
    %2184 = vmatpush1.msra.mxu0 0.0
    %2185 = vmatprep.subr.mxu0 0.0
    %2186 = vmatpush1.msra.mxu0 0.0
    %2187 = vmatprep.subr.mxu0 0.0
    %2188 = vmatpush1.msra.mxu0 0.0
    %2189 = vmatprep.subr.mxu0 0.0
    %2190 = vmatpush1.msra.mxu0 0.0
    %2191 = vmatprep.subr.mxu0 0.0
    %2192 = vmatpush1.msra.mxu0 0.0
    %2193 = vmatprep.subr.mxu0 0.0
    %2194 = vmatpush1.msra.mxu0 0.0
    %2195 = vmatprep.subr.mxu0 0.0
    %2196 = vmatpush1.msra.mxu0 0.0
    %2197 = vmatprep.subr.mxu0 0.0
    %2198 = vmatpush1.msra.mxu0 0.0
    %2199 = vmatprep.subr.mxu0 0.0
    %2200 = vmatpush1.msra.mxu0 0.0
    %2201 = vmatprep.subr.mxu0 0.0
    %2202 = vmatpush1.msra.mxu0 0.0
    %2203 = vmatprep.subr.mxu0 0.0
    %2204 = vmatpush1.msra.mxu0 0.0
    %2205 = vmatprep.subr.mxu0 0.0
    %2206 = vmatpush1.msra.mxu0 0.0
    %2207 = vmatprep.subr.mxu0 0.0
    %2208 = vmatpush1.msra.mxu0 0.0
    %2209 = vmatprep.subr.mxu0 0.0
    %2210 = vmatpush1.msra.mxu0 0.0
    %2211 = vmatprep.subr.mxu0 0.0
    %2212 = vmatpush1.msra.mxu0 0.0
    %2213 = vmatprep.subr.mxu0 0.0
    %2214 = vmatpush1.msra.mxu0 0.0
    %2215 = vmatprep.subr.mxu0 0.0
    %2216 = vmatpush1.msra.mxu0 0.0
    %2217 = vmatprep.subr.mxu0 0.0
    %2218 = vmatpush1.msra.mxu0 0.0
    %2219 = vmatprep.subr.mxu0 0.0
    %2220 = vmatpush1.msra.mxu0 0.0
    %2221 = vmatprep.subr.mxu0 0.0
    %2222 = vmatpush1.msra.mxu0 0.0
    %2223 = vmatprep.subr.mxu0 0.0
    %2224 = vmatpush1.msra.mxu0 0.0
    %2225 = vmatprep.subr.mxu0 0.0
    %2226 = vmatpush1.msra.mxu0 0.0
    %2227 = vmatprep.subr.mxu0 0.0
    %2228 = vmatpush1.msra.mxu0 0.0
    %2229 = vmatprep.subr.mxu0 0.0
    %2230 = vmatpush1.msra.mxu0 0.0
    %2231 = vmatprep.subr.mxu0 0.0
    %2232 = vmatpush1.msra.mxu0 0.0
    %2233 = vmatprep.subr.mxu0 0.0
    %2234 = vmatpush1.msra.mxu0 0.0
    %2235 = vmatprep.subr.mxu0 0.0
    %2236 = vmatpush1.msra.mxu0 0.0
    %2237 = vmatprep.subr.mxu0 0.0
    %2238 = vmatpush1.msra.mxu0 0.0
    %2239 = vmatprep.subr.mxu0 0.0
    %2240 = vmatpush1.msra.mxu0 0.0
    %2241 = vmatprep.mubr.f32.mxu0 0.0
    %2242 = vmatmul.mubr.f32.gmra.mrb[0].mxu0 %v2104
    %v2243 = vpop.f32.mrb[0].mxu0
    %v2244 = vadd.f32 0.0, %v2243
    %v2245 = vpop.f32.mrb[0].mxu0
    %2246 = vdwg.mxu0
    %v2247 = vadd.f32 %v2088, %v2173
    %v2248 = vadd.f32 %v2089, %v2175
    %v2249 = vadd.f32 %v2090, %v2244
    %v2250 = vld [vmem:[%s808] sm:$0xff]
    %2251 = vrot.lane.b32.xlu0 %v1466, 108
    %v2252 = vpop.permute.xlu0 %2251
    %2253 = vrot.lane.b32.xlu0 %v1467, 108
    %v2254 = vpop.permute.xlu0 %2253
    %2255 = vrot.lane.b32.xlu0 %v1468, 108
    %v2256 = vpop.permute.xlu0 %2255
    %v2257 = vsel %vm816, %v2252, %v2254
    %v2258 = vsel %vm816, %v2254, %v2256
    %v2263 = vsel %vm36, %v2250, 0
    %2265 = vmatprep.subr.mxu0 %v2258
    %2266 = vmatpush1.msra.mxu0 %v2257
    %2267 = vmatprep.subr.mxu0 0.0
    %2268 = vmatpush1.msra.mxu0 0.0
    %2269 = vmatprep.subr.mxu0 0.0
    %2270 = vmatpush1.msra.mxu0 0.0
    %2271 = vmatprep.subr.mxu0 0.0
    %2272 = vmatpush1.msra.mxu0 0.0
    %2273 = vmatprep.subr.mxu0 0.0
    %2274 = vmatpush1.msra.mxu0 0.0
    %2275 = vmatprep.subr.mxu0 0.0
    %2276 = vmatpush1.msra.mxu0 0.0
    %2277 = vmatprep.subr.mxu0 0.0
    %2278 = vmatpush1.msra.mxu0 0.0
    %2279 = vmatprep.subr.mxu0 0.0
    %2280 = vmatpush1.msra.mxu0 0.0
    %2281 = vmatprep.subr.mxu0 0.0
    %2282 = vmatpush1.msra.mxu0 0.0
    %2283 = vmatprep.subr.mxu0 0.0
    %2284 = vmatpush1.msra.mxu0 0.0
    %2285 = vmatprep.subr.mxu0 0.0
    %2286 = vmatpush1.msra.mxu0 0.0
    %2287 = vmatprep.subr.mxu0 0.0
    %2288 = vmatpush1.msra.mxu0 0.0
    %2289 = vmatprep.subr.mxu0 0.0
    %2290 = vmatpush1.msra.mxu0 0.0
    %2291 = vmatprep.subr.mxu0 0.0
    %2292 = vmatpush1.msra.mxu0 0.0
    %2293 = vmatprep.subr.mxu0 0.0
    %2294 = vmatpush1.msra.mxu0 0.0
    %2295 = vmatprep.subr.mxu0 0.0
    %2296 = vmatpush1.msra.mxu0 0.0
    %2297 = vmatprep.subr.mxu0 0.0
    %2298 = vmatpush1.msra.mxu0 0.0
    %2299 = vmatprep.subr.mxu0 0.0
    %2300 = vmatpush1.msra.mxu0 0.0
    %2301 = vmatprep.subr.mxu0 0.0
    %2302 = vmatpush1.msra.mxu0 0.0
    %2303 = vmatprep.subr.mxu0 0.0
    %2304 = vmatpush1.msra.mxu0 0.0
    %2305 = vmatprep.subr.mxu0 0.0
    %2306 = vmatpush1.msra.mxu0 0.0
    %2307 = vmatprep.subr.mxu0 0.0
    %2308 = vmatpush1.msra.mxu0 0.0
    %2309 = vmatprep.subr.mxu0 0.0
    %2310 = vmatpush1.msra.mxu0 0.0
    %2311 = vmatprep.subr.mxu0 0.0
    %2312 = vmatpush1.msra.mxu0 0.0
    %2313 = vmatprep.subr.mxu0 0.0
    %2314 = vmatpush1.msra.mxu0 0.0
    %2315 = vmatprep.subr.mxu0 0.0
    %2316 = vmatpush1.msra.mxu0 0.0
    %2317 = vmatprep.subr.mxu0 0.0
    %2318 = vmatpush1.msra.mxu0 0.0
    %2319 = vmatprep.subr.mxu0 0.0
    %2320 = vmatpush1.msra.mxu0 0.0
    %2321 = vmatprep.subr.mxu0 0.0
    %2322 = vmatpush1.msra.mxu0 0.0
    %2323 = vmatprep.subr.mxu0 0.0
    %2324 = vmatpush1.msra.mxu0 0.0
    %2325 = vmatprep.subr.mxu0 0.0
    %2326 = vmatpush1.msra.mxu0 0.0
    %2327 = vmatprep.subr.mxu0 0.0
    %2328 = vmatpush1.msra.mxu0 0.0
    %2329 = vmatprep.mubr.f32.mxu0 0.0
    %2330 = vmatmul.mubr.f32.gmra.mrb[0].mxu0 %v2263
    %v2331 = vpop.f32.mrb[0].mxu0
    %v2332 = vadd.f32 0.0, %v2331
    %v2333 = vpop.f32.mrb[0].mxu0
    %v2334 = vadd.f32 0.0, %v2333
    %2335 = vdwg.mxu0
    %2336 = vmatprep.subr.mxu0 0.0
    %2337 = vmatpush1.msra.mxu0 %v2256
    %2338 = vmatprep.subr.mxu0 0.0
    %2339 = vmatpush1.msra.mxu0 0.0
    %2340 = vmatprep.subr.mxu0 0.0
    %2341 = vmatpush1.msra.mxu0 0.0
    %2342 = vmatprep.subr.mxu0 0.0
    %2343 = vmatpush1.msra.mxu0 0.0
    %2344 = vmatprep.subr.mxu0 0.0
    %2345 = vmatpush1.msra.mxu0 0.0
    %2346 = vmatprep.subr.mxu0 0.0
    %2347 = vmatpush1.msra.mxu0 0.0
    %2348 = vmatprep.subr.mxu0 0.0
    %2349 = vmatpush1.msra.mxu0 0.0
    %2350 = vmatprep.subr.mxu0 0.0
    %2351 = vmatpush1.msra.mxu0 0.0
    %2352 = vmatprep.subr.mxu0 0.0
    %2353 = vmatpush1.msra.mxu0 0.0
    %2354 = vmatprep.subr.mxu0 0.0
    %2355 = vmatpush1.msra.mxu0 0.0
    %2356 = vmatprep.subr.mxu0 0.0
    %2357 = vmatpush1.msra.mxu0 0.0
    %2358 = vmatprep.subr.mxu0 0.0
    %2359 = vmatpush1.msra.mxu0 0.0
    %2360 = vmatprep.subr.mxu0 0.0
    %2361 = vmatpush1.msra.mxu0 0.0
    %2362 = vmatprep.subr.mxu0 0.0
    %2363 = vmatpush1.msra.mxu0 0.0
    %2364 = vmatprep.subr.mxu0 0.0
    %2365 = vmatpush1.msra.mxu0 0.0
    %2366 = vmatprep.subr.mxu0 0.0
    %2367 = vmatpush1.msra.mxu0 0.0
    %2368 = vmatprep.subr.mxu0 0.0
    %2369 = vmatpush1.msra.mxu0 0.0
    %2370 = vmatprep.subr.mxu0 0.0
    %2371 = vmatpush1.msra.mxu0 0.0
    %2372 = vmatprep.subr.mxu0 0.0
    %2373 = vmatpush1.msra.mxu0 0.0
    %2374 = vmatprep.subr.mxu0 0.0
    %2375 = vmatpush1.msra.mxu0 0.0
    %2376 = vmatprep.subr.mxu0 0.0
    %2377 = vmatpush1.msra.mxu0 0.0
    %2378 = vmatprep.subr.mxu0 0.0
    %2379 = vmatpush1.msra.mxu0 0.0
    %2380 = vmatprep.subr.mxu0 0.0
    %2381 = vmatpush1.msra.mxu0 0.0
    %2382 = vmatprep.subr.mxu0 0.0
    %2383 = vmatpush1.msra.mxu0 0.0
    %2384 = vmatprep.subr.mxu0 0.0
    %2385 = vmatpush1.msra.mxu0 0.0
    %2386 = vmatprep.subr.mxu0 0.0
    %2387 = vmatpush1.msra.mxu0 0.0
    %2388 = vmatprep.subr.mxu0 0.0
    %2389 = vmatpush1.msra.mxu0 0.0
    %2390 = vmatprep.subr.mxu0 0.0
    %2391 = vmatpush1.msra.mxu0 0.0
    %2392 = vmatprep.subr.mxu0 0.0
    %2393 = vmatpush1.msra.mxu0 0.0
    %2394 = vmatprep.subr.mxu0 0.0
    %2395 = vmatpush1.msra.mxu0 0.0
    %2396 = vmatprep.subr.mxu0 0.0
    %2397 = vmatpush1.msra.mxu0 0.0
    %2398 = vmatprep.subr.mxu0 0.0
    %2399 = vmatpush1.msra.mxu0 0.0
    %2400 = vmatprep.mubr.f32.mxu0 0.0
    %2401 = vmatmul.mubr.f32.gmra.mrb[0].mxu0 %v2263
    %v2402 = vpop.f32.mrb[0].mxu0
    %v2403 = vadd.f32 0.0, %v2402
    %v2404 = vpop.f32.mrb[0].mxu0
    %2405 = vdwg.mxu0
    %v2406 = vadd.f32 %v2247, %v2332
    %v2407 = vadd.f32 %v2248, %v2334
    %v2408 = vadd.f32 %v2249, %v2403
    %v2409 = vld [vmem:[%s969] sm:$0xff]
    %2410 = vrot.lane.b32.xlu0 %v1466, 92
    %v2411 = vpop.permute.xlu0 %2410
    %2412 = vrot.lane.b32.xlu0 %v1467, 92
    %v2413 = vpop.permute.xlu0 %2412
    %2414 = vrot.lane.b32.xlu0 %v1468, 92
    %v2415 = vpop.permute.xlu0 %2414
    %v2416 = vsel %vm977, %v2411, %v2413
    %v2417 = vsel %vm977, %v2413, %v2415
    %v2422 = vsel %vm36, %v2409, 0
    %2424 = vmatprep.subr.mxu0 %v2417
    %2425 = vmatpush1.msra.mxu0 %v2416
    %2426 = vmatprep.subr.mxu0 0.0
    %2427 = vmatpush1.msra.mxu0 0.0
    %2428 = vmatprep.subr.mxu0 0.0
    %2429 = vmatpush1.msra.mxu0 0.0
    %2430 = vmatprep.subr.mxu0 0.0
    %2431 = vmatpush1.msra.mxu0 0.0
    %2432 = vmatprep.subr.mxu0 0.0
    %2433 = vmatpush1.msra.mxu0 0.0
    %2434 = vmatprep.subr.mxu0 0.0
    %2435 = vmatpush1.msra.mxu0 0.0
    %2436 = vmatprep.subr.mxu0 0.0
    %2437 = vmatpush1.msra.mxu0 0.0
    %2438 = vmatprep.subr.mxu0 0.0
    %2439 = vmatpush1.msra.mxu0 0.0
    %2440 = vmatprep.subr.mxu0 0.0
    %2441 = vmatpush1.msra.mxu0 0.0
    %2442 = vmatprep.subr.mxu0 0.0
    %2443 = vmatpush1.msra.mxu0 0.0
    %2444 = vmatprep.subr.mxu0 0.0
    %2445 = vmatpush1.msra.mxu0 0.0
    %2446 = vmatprep.subr.mxu0 0.0
    %2447 = vmatpush1.msra.mxu0 0.0
    %2448 = vmatprep.subr.mxu0 0.0
    %2449 = vmatpush1.msra.mxu0 0.0
    %2450 = vmatprep.subr.mxu0 0.0
    %2451 = vmatpush1.msra.mxu0 0.0
    %2452 = vmatprep.subr.mxu0 0.0
    %2453 = vmatpush1.msra.mxu0 0.0
    %2454 = vmatprep.subr.mxu0 0.0
    %2455 = vmatpush1.msra.mxu0 0.0
    %2456 = vmatprep.subr.mxu0 0.0
    %2457 = vmatpush1.msra.mxu0 0.0
    %2458 = vmatprep.subr.mxu0 0.0
    %2459 = vmatpush1.msra.mxu0 0.0
    %2460 = vmatprep.subr.mxu0 0.0
    %2461 = vmatpush1.msra.mxu0 0.0
    %2462 = vmatprep.subr.mxu0 0.0
    %2463 = vmatpush1.msra.mxu0 0.0
    %2464 = vmatprep.subr.mxu0 0.0
    %2465 = vmatpush1.msra.mxu0 0.0
    %2466 = vmatprep.subr.mxu0 0.0
    %2467 = vmatpush1.msra.mxu0 0.0
    %2468 = vmatprep.subr.mxu0 0.0
    %2469 = vmatpush1.msra.mxu0 0.0
    %2470 = vmatprep.subr.mxu0 0.0
    %2471 = vmatpush1.msra.mxu0 0.0
    %2472 = vmatprep.subr.mxu0 0.0
    %2473 = vmatpush1.msra.mxu0 0.0
    %2474 = vmatprep.subr.mxu0 0.0
    %2475 = vmatpush1.msra.mxu0 0.0
    %2476 = vmatprep.subr.mxu0 0.0
    %2477 = vmatpush1.msra.mxu0 0.0
    %2478 = vmatprep.subr.mxu0 0.0
    %2479 = vmatpush1.msra.mxu0 0.0
    %2480 = vmatprep.subr.mxu0 0.0
    %2481 = vmatpush1.msra.mxu0 0.0
    %2482 = vmatprep.subr.mxu0 0.0
    %2483 = vmatpush1.msra.mxu0 0.0
    %2484 = vmatprep.subr.mxu0 0.0
    %2485 = vmatpush1.msra.mxu0 0.0
    %2486 = vmatprep.subr.mxu0 0.0
    %2487 = vmatpush1.msra.mxu0 0.0
    %2488 = vmatprep.mubr.f32.mxu0 0.0
    %2489 = vmatmul.mubr.f32.gmra.mrb[0].mxu0 %v2422
    %v2490 = vpop.f32.mrb[0].mxu0
    %v2491 = vadd.f32 0.0, %v2490
    %v2492 = vpop.f32.mrb[0].mxu0
    %v2493 = vadd.f32 0.0, %v2492
    %2494 = vdwg.mxu0
    %2495 = vmatprep.subr.mxu0 0.0
    %2496 = vmatpush1.msra.mxu0 %v2415
    %2497 = vmatprep.subr.mxu0 0.0
    %2498 = vmatpush1.msra.mxu0 0.0
    %2499 = vmatprep.subr.mxu0 0.0
    %2500 = vmatpush1.msra.mxu0 0.0
    %2501 = vmatprep.subr.mxu0 0.0
    %2502 = vmatpush1.msra.mxu0 0.0
    %2503 = vmatprep.subr.mxu0 0.0
    %2504 = vmatpush1.msra.mxu0 0.0
    %2505 = vmatprep.subr.mxu0 0.0
    %2506 = vmatpush1.msra.mxu0 0.0
    %2507 = vmatprep.subr.mxu0 0.0
    %2508 = vmatpush1.msra.mxu0 0.0
    %2509 = vmatprep.subr.mxu0 0.0
    %2510 = vmatpush1.msra.mxu0 0.0
    %2511 = vmatprep.subr.mxu0 0.0
    %2512 = vmatpush1.msra.mxu0 0.0
    %2513 = vmatprep.subr.mxu0 0.0
    %2514 = vmatpush1.msra.mxu0 0.0
    %2515 = vmatprep.subr.mxu0 0.0
    %2516 = vmatpush1.msra.mxu0 0.0
    %2517 = vmatprep.subr.mxu0 0.0
    %2518 = vmatpush1.msra.mxu0 0.0
    %2519 = vmatprep.subr.mxu0 0.0
    %2520 = vmatpush1.msra.mxu0 0.0
    %2521 = vmatprep.subr.mxu0 0.0
    %2522 = vmatpush1.msra.mxu0 0.0
    %2523 = vmatprep.subr.mxu0 0.0
    %2524 = vmatpush1.msra.mxu0 0.0
    %2525 = vmatprep.subr.mxu0 0.0
    %2526 = vmatpush1.msra.mxu0 0.0
    %2527 = vmatprep.subr.mxu0 0.0
    %2528 = vmatpush1.msra.mxu0 0.0
    %2529 = vmatprep.subr.mxu0 0.0
    %2530 = vmatpush1.msra.mxu0 0.0
    %2531 = vmatprep.subr.mxu0 0.0
    %2532 = vmatpush1.msra.mxu0 0.0
    %2533 = vmatprep.subr.mxu0 0.0
    %2534 = vmatpush1.msra.mxu0 0.0
    %2535 = vmatprep.subr.mxu0 0.0
    %2536 = vmatpush1.msra.mxu0 0.0
    %2537 = vmatprep.subr.mxu0 0.0
    %2538 = vmatpush1.msra.mxu0 0.0
    %2539 = vmatprep.subr.mxu0 0.0
    %2540 = vmatpush1.msra.mxu0 0.0
    %2541 = vmatprep.subr.mxu0 0.0
    %2542 = vmatpush1.msra.mxu0 0.0
    %2543 = vmatprep.subr.mxu0 0.0
    %2544 = vmatpush1.msra.mxu0 0.0
    %2545 = vmatprep.subr.mxu0 0.0
    %2546 = vmatpush1.msra.mxu0 0.0
    %2547 = vmatprep.subr.mxu0 0.0
    %2548 = vmatpush1.msra.mxu0 0.0
    %2549 = vmatprep.subr.mxu0 0.0
    %2550 = vmatpush1.msra.mxu0 0.0
    %2551 = vmatprep.subr.mxu0 0.0
    %2552 = vmatpush1.msra.mxu0 0.0
    %2553 = vmatprep.subr.mxu0 0.0
    %2554 = vmatpush1.msra.mxu0 0.0
    %2555 = vmatprep.subr.mxu0 0.0
    %2556 = vmatpush1.msra.mxu0 0.0
    %2557 = vmatprep.subr.mxu0 0.0
    %2558 = vmatpush1.msra.mxu0 0.0
    %2559 = vmatprep.mubr.f32.mxu0 0.0
    %2560 = vmatmul.mubr.f32.gmra.mrb[0].mxu0 %v2422
    %v2561 = vpop.f32.mrb[0].mxu0
    %v2562 = vadd.f32 0.0, %v2561
    %v2563 = vpop.f32.mrb[0].mxu0
    %2564 = vdwg.mxu0
    %v2565 = vadd.f32 %v2406, %v2491
    %v2566 = vadd.f32 %v2407, %v2493
    %v2567 = vadd.f32 %v2408, %v2562
    %v2568 = vld [vmem:[%s1130] sm:$0xff]
    %2569 = vrot.lane.b32.xlu0 %v1466, 91
    %v2570 = vpop.permute.xlu0 %2569
    %2571 = vrot.lane.b32.xlu0 %v1467, 91
    %v2572 = vpop.permute.xlu0 %2571
    %2573 = vrot.lane.b32.xlu0 %v1468, 91
    %v2574 = vpop.permute.xlu0 %2573
    %v2575 = vsel %vm1138, %v2570, %v2572
    %v2576 = vsel %vm1138, %v2572, %v2574
    %v2581 = vsel %vm36, %v2568, 0
    %2583 = vmatprep.subr.mxu0 %v2576
    %2584 = vmatpush1.msra.mxu0 %v2575
    %2585 = vmatprep.subr.mxu0 0.0
    %2586 = vmatpush1.msra.mxu0 0.0
    %2587 = vmatprep.subr.mxu0 0.0
    %2588 = vmatpush1.msra.mxu0 0.0
    %2589 = vmatprep.subr.mxu0 0.0
    %2590 = vmatpush1.msra.mxu0 0.0
    %2591 = vmatprep.subr.mxu0 0.0
    %2592 = vmatpush1.msra.mxu0 0.0
    %2593 = vmatprep.subr.mxu0 0.0
    %2594 = vmatpush1.msra.mxu0 0.0
    %2595 = vmatprep.subr.mxu0 0.0
    %2596 = vmatpush1.msra.mxu0 0.0
    %2597 = vmatprep.subr.mxu0 0.0
    %2598 = vmatpush1.msra.mxu0 0.0
    %2599 = vmatprep.subr.mxu0 0.0
    %2600 = vmatpush1.msra.mxu0 0.0
    %2601 = vmatprep.subr.mxu0 0.0
    %2602 = vmatpush1.msra.mxu0 0.0
    %2603 = vmatprep.subr.mxu0 0.0
    %2604 = vmatpush1.msra.mxu0 0.0
    %2605 = vmatprep.subr.mxu0 0.0
    %2606 = vmatpush1.msra.mxu0 0.0
    %2607 = vmatprep.subr.mxu0 0.0
    %2608 = vmatpush1.msra.mxu0 0.0
    %2609 = vmatprep.subr.mxu0 0.0
    %2610 = vmatpush1.msra.mxu0 0.0
    %2611 = vmatprep.subr.mxu0 0.0
    %2612 = vmatpush1.msra.mxu0 0.0
    %2613 = vmatprep.subr.mxu0 0.0
    %2614 = vmatpush1.msra.mxu0 0.0
    %2615 = vmatprep.subr.mxu0 0.0
    %2616 = vmatpush1.msra.mxu0 0.0
    %2617 = vmatprep.subr.mxu0 0.0
    %2618 = vmatpush1.msra.mxu0 0.0
    %2619 = vmatprep.subr.mxu0 0.0
    %2620 = vmatpush1.msra.mxu0 0.0
    %2621 = vmatprep.subr.mxu0 0.0
    %2622 = vmatpush1.msra.mxu0 0.0
    %2623 = vmatprep.subr.mxu0 0.0
    %2624 = vmatpush1.msra.mxu0 0.0
    %2625 = vmatprep.subr.mxu0 0.0
    %2626 = vmatpush1.msra.mxu0 0.0
    %2627 = vmatprep.subr.mxu0 0.0
    %2628 = vmatpush1.msra.mxu0 0.0
    %2629 = vmatprep.subr.mxu0 0.0
    %2630 = vmatpush1.msra.mxu0 0.0
    %2631 = vmatprep.subr.mxu0 0.0
    %2632 = vmatpush1.msra.mxu0 0.0
    %2633 = vmatprep.subr.mxu0 0.0
    %2634 = vmatpush1.msra.mxu0 0.0
    %2635 = vmatprep.subr.mxu0 0.0
    %2636 = vmatpush1.msra.mxu0 0.0
    %2637 = vmatprep.subr.mxu0 0.0
    %2638 = vmatpush1.msra.mxu0 0.0
    %2639 = vmatprep.subr.mxu0 0.0
    %2640 = vmatpush1.msra.mxu0 0.0
    %2641 = vmatprep.subr.mxu0 0.0
    %2642 = vmatpush1.msra.mxu0 0.0
    %2643 = vmatprep.subr.mxu0 0.0
    %2644 = vmatpush1.msra.mxu0 0.0
    %2645 = vmatprep.subr.mxu0 0.0
    %2646 = vmatpush1.msra.mxu0 0.0
    %2647 = vmatprep.mubr.f32.mxu0 0.0
    %2648 = vmatmul.mubr.f32.gmra.mrb[0].mxu0 %v2581
    %v2649 = vpop.f32.mrb[0].mxu0
    %v2650 = vadd.f32 0.0, %v2649
    %v2651 = vpop.f32.mrb[0].mxu0
    %v2652 = vadd.f32 0.0, %v2651
    %2653 = vdwg.mxu0
    %2654 = vmatprep.subr.mxu0 0.0
    %2655 = vmatpush1.msra.mxu0 %v2574
    %2656 = vmatprep.subr.mxu0 0.0
    %2657 = vmatpush1.msra.mxu0 0.0
    %2658 = vmatprep.subr.mxu0 0.0
    %2659 = vmatpush1.msra.mxu0 0.0
    %2660 = vmatprep.subr.mxu0 0.0
    %2661 = vmatpush1.msra.mxu0 0.0
    %2662 = vmatprep.subr.mxu0 0.0
    %2663 = vmatpush1.msra.mxu0 0.0
    %2664 = vmatprep.subr.mxu0 0.0
    %2665 = vmatpush1.msra.mxu0 0.0
    %2666 = vmatprep.subr.mxu0 0.0
    %2667 = vmatpush1.msra.mxu0 0.0
    %2668 = vmatprep.subr.mxu0 0.0
    %2669 = vmatpush1.msra.mxu0 0.0
    %2670 = vmatprep.subr.mxu0 0.0
    %2671 = vmatpush1.msra.mxu0 0.0
    %2672 = vmatprep.subr.mxu0 0.0
    %2673 = vmatpush1.msra.mxu0 0.0
    %2674 = vmatprep.subr.mxu0 0.0
    %2675 = vmatpush1.msra.mxu0 0.0
    %2676 = vmatprep.subr.mxu0 0.0
    %2677 = vmatpush1.msra.mxu0 0.0
    %2678 = vmatprep.subr.mxu0 0.0
    %2679 = vmatpush1.msra.mxu0 0.0
    %2680 = vmatprep.subr.mxu0 0.0
    %2681 = vmatpush1.msra.mxu0 0.0
    %2682 = vmatprep.subr.mxu0 0.0
    %2683 = vmatpush1.msra.mxu0 0.0
    %2684 = vmatprep.subr.mxu0 0.0
    %2685 = vmatpush1.msra.mxu0 0.0
    %2686 = vmatprep.subr.mxu0 0.0
    %2687 = vmatpush1.msra.mxu0 0.0
    %2688 = vmatprep.subr.mxu0 0.0
    %2689 = vmatpush1.msra.mxu0 0.0
    %2690 = vmatprep.subr.mxu0 0.0
    %2691 = vmatpush1.msra.mxu0 0.0
    %2692 = vmatprep.subr.mxu0 0.0
    %2693 = vmatpush1.msra.mxu0 0.0
    %2694 = vmatprep.subr.mxu0 0.0
    %2695 = vmatpush1.msra.mxu0 0.0
    %2696 = vmatprep.subr.mxu0 0.0
    %2697 = vmatpush1.msra.mxu0 0.0
    %2698 = vmatprep.subr.mxu0 0.0
    %2699 = vmatpush1.msra.mxu0 0.0
    %2700 = vmatprep.subr.mxu0 0.0
    %2701 = vmatpush1.msra.mxu0 0.0
    %2702 = vmatprep.subr.mxu0 0.0
    %2703 = vmatpush1.msra.mxu0 0.0
    %2704 = vmatprep.subr.mxu0 0.0
    %2705 = vmatpush1.msra.mxu0 0.0
    %2706 = vmatprep.subr.mxu0 0.0
    %2707 = vmatpush1.msra.mxu0 0.0
    %2708 = vmatprep.subr.mxu0 0.0
    %2709 = vmatpush1.msra.mxu0 0.0
    %2710 = vmatprep.subr.mxu0 0.0
    %2711 = vmatpush1.msra.mxu0 0.0
    %2712 = vmatprep.subr.mxu0 0.0
    %2713 = vmatpush1.msra.mxu0 0.0
    %2714 = vmatprep.subr.mxu0 0.0
    %2715 = vmatpush1.msra.mxu0 0.0
    %2716 = vmatprep.subr.mxu0 0.0
    %2717 = vmatpush1.msra.mxu0 0.0
    %2718 = vmatprep.mubr.f32.mxu0 0.0
    %2719 = vmatmul.mubr.f32.gmra.mrb[0].mxu0 %v2581
    %v2720 = vpop.f32.mrb[0].mxu0
    %v2721 = vadd.f32 0.0, %v2720
    %v2722 = vpop.f32.mrb[0].mxu0
    %2723 = vdwg.mxu0
    %v2724 = vadd.f32 %v2565, %v2650
    %v2725 = vadd.f32 %v2566, %v2652
    %v2726 = vadd.f32 %v2567, %v2721
    %v2727 = vld [vmem:[%s1291] sm:$0xff]
    %2728 = vrot.lane.b32.xlu0 %v1466, 90
    %v2729 = vpop.permute.xlu0 %2728
    %2730 = vrot.lane.b32.xlu0 %v1467, 90
    %v2731 = vpop.permute.xlu0 %2730
    %2732 = vrot.lane.b32.xlu0 %v1468, 90
    %v2733 = vpop.permute.xlu0 %2732
    %v2734 = vsel %vm1299, %v2729, %v2731
    %v2735 = vsel %vm1299, %v2731, %v2733
    %v2740 = vsel %vm36, %v2727, 0
    %2742 = vmatprep.subr.mxu0 %v2735
    %2743 = vmatpush1.msra.mxu0 %v2734
    %2744 = vmatprep.subr.mxu0 0.0
    %2745 = vmatpush1.msra.mxu0 0.0
    %2746 = vmatprep.subr.mxu0 0.0
    %2747 = vmatpush1.msra.mxu0 0.0
    %2748 = vmatprep.subr.mxu0 0.0
    %2749 = vmatpush1.msra.mxu0 0.0
    %2750 = vmatprep.subr.mxu0 0.0
    %2751 = vmatpush1.msra.mxu0 0.0
    %2752 = vmatprep.subr.mxu0 0.0
    %2753 = vmatpush1.msra.mxu0 0.0
    %2754 = vmatprep.subr.mxu0 0.0
    %2755 = vmatpush1.msra.mxu0 0.0
    %2756 = vmatprep.subr.mxu0 0.0
    %2757 = vmatpush1.msra.mxu0 0.0
    %2758 = vmatprep.subr.mxu0 0.0
    %2759 = vmatpush1.msra.mxu0 0.0
    %2760 = vmatprep.subr.mxu0 0.0
    %2761 = vmatpush1.msra.mxu0 0.0
    %2762 = vmatprep.subr.mxu0 0.0
    %2763 = vmatpush1.msra.mxu0 0.0
    %2764 = vmatprep.subr.mxu0 0.0
    %2765 = vmatpush1.msra.mxu0 0.0
    %2766 = vmatprep.subr.mxu0 0.0
    %2767 = vmatpush1.msra.mxu0 0.0
    %2768 = vmatprep.subr.mxu0 0.0
    %2769 = vmatpush1.msra.mxu0 0.0
    %2770 = vmatprep.subr.mxu0 0.0
    %2771 = vmatpush1.msra.mxu0 0.0
    %2772 = vmatprep.subr.mxu0 0.0
    %2773 = vmatpush1.msra.mxu0 0.0
    %2774 = vmatprep.subr.mxu0 0.0
    %2775 = vmatpush1.msra.mxu0 0.0
    %2776 = vmatprep.subr.mxu0 0.0
    %2777 = vmatpush1.msra.mxu0 0.0
    %2778 = vmatprep.subr.mxu0 0.0
    %2779 = vmatpush1.msra.mxu0 0.0
    %2780 = vmatprep.subr.mxu0 0.0
    %2781 = vmatpush1.msra.mxu0 0.0
    %2782 = vmatprep.subr.mxu0 0.0
    %2783 = vmatpush1.msra.mxu0 0.0
    %2784 = vmatprep.subr.mxu0 0.0
    %2785 = vmatpush1.msra.mxu0 0.0
    %2786 = vmatprep.subr.mxu0 0.0
    %2787 = vmatpush1.msra.mxu0 0.0
    %2788 = vmatprep.subr.mxu0 0.0
    %2789 = vmatpush1.msra.mxu0 0.0
    %2790 = vmatprep.subr.mxu0 0.0
    %2791 = vmatpush1.msra.mxu0 0.0
    %2792 = vmatprep.subr.mxu0 0.0
    %2793 = vmatpush1.msra.mxu0 0.0
    %2794 = vmatprep.subr.mxu0 0.0
    %2795 = vmatpush1.msra.mxu0 0.0
    %2796 = vmatprep.subr.mxu0 0.0
    %2797 = vmatpush1.msra.mxu0 0.0
    %2798 = vmatprep.subr.mxu0 0.0
    %2799 = vmatpush1.msra.mxu0 0.0
    %2800 = vmatprep.subr.mxu0 0.0
    %2801 = vmatpush1.msra.mxu0 0.0
    %2802 = vmatprep.subr.mxu0 0.0
    %2803 = vmatpush1.msra.mxu0 0.0
    %2804 = vmatprep.subr.mxu0 0.0
    %2805 = vmatpush1.msra.mxu0 0.0
    %2806 = vmatprep.mubr.f32.mxu0 0.0
    %2807 = vmatmul.mubr.f32.gmra.mrb[0].mxu0 %v2740
    %v2808 = vpop.f32.mrb[0].mxu0
    %v2809 = vadd.f32 0.0, %v2808
    %v2810 = vpop.f32.mrb[0].mxu0
    %v2811 = vadd.f32 0.0, %v2810
    %2812 = vdwg.mxu0
    %2813 = vmatprep.subr.mxu0 0.0
    %2814 = vmatpush1.msra.mxu0 %v2733
    %2815 = vmatprep.subr.mxu0 0.0
    %2816 = vmatpush1.msra.mxu0 0.0
    %2817 = vmatprep.subr.mxu0 0.0
    %2818 = vmatpush1.msra.mxu0 0.0
    %2819 = vmatprep.subr.mxu0 0.0
    %2820 = vmatpush1.msra.mxu0 0.0
    %2821 = vmatprep.subr.mxu0 0.0
    %2822 = vmatpush1.msra.mxu0 0.0
    %2823 = vmatprep.subr.mxu0 0.0
    %2824 = vmatpush1.msra.mxu0 0.0
    %2825 = vmatprep.subr.mxu0 0.0
    %2826 = vmatpush1.msra.mxu0 0.0
    %2827 = vmatprep.subr.mxu0 0.0
    %2828 = vmatpush1.msra.mxu0 0.0
    %2829 = vmatprep.subr.mxu0 0.0
    %2830 = vmatpush1.msra.mxu0 0.0
    %2831 = vmatprep.subr.mxu0 0.0
    %2832 = vmatpush1.msra.mxu0 0.0
    %2833 = vmatprep.subr.mxu0 0.0
    %2834 = vmatpush1.msra.mxu0 0.0
    %2835 = vmatprep.subr.mxu0 0.0
    %2836 = vmatpush1.msra.mxu0 0.0
    %2837 = vmatprep.subr.mxu0 0.0
    %2838 = vmatpush1.msra.mxu0 0.0
    %2839 = vmatprep.subr.mxu0 0.0
    %2840 = vmatpush1.msra.mxu0 0.0
    %2841 = vmatprep.subr.mxu0 0.0
    %2842 = vmatpush1.msra.mxu0 0.0
    %2843 = vmatprep.subr.mxu0 0.0
    %2844 = vmatpush1.msra.mxu0 0.0
    %2845 = vmatprep.subr.mxu0 0.0
    %2846 = vmatpush1.msra.mxu0 0.0
    %2847 = vmatprep.subr.mxu0 0.0
    %2848 = vmatpush1.msra.mxu0 0.0
    %2849 = vmatprep.subr.mxu0 0.0
    %2850 = vmatpush1.msra.mxu0 0.0
    %2851 = vmatprep.subr.mxu0 0.0
    %2852 = vmatpush1.msra.mxu0 0.0
    %2853 = vmatprep.subr.mxu0 0.0
    %2854 = vmatpush1.msra.mxu0 0.0
    %2855 = vmatprep.subr.mxu0 0.0
    %2856 = vmatpush1.msra.mxu0 0.0
    %2857 = vmatprep.subr.mxu0 0.0
    %2858 = vmatpush1.msra.mxu0 0.0
    %2859 = vmatprep.subr.mxu0 0.0
    %2860 = vmatpush1.msra.mxu0 0.0
    %2861 = vmatprep.subr.mxu0 0.0
    %2862 = vmatpush1.msra.mxu0 0.0
    %2863 = vmatprep.subr.mxu0 0.0
    %2864 = vmatpush1.msra.mxu0 0.0
    %2865 = vmatprep.subr.mxu0 0.0
    %2866 = vmatpush1.msra.mxu0 0.0
    %2867 = vmatprep.subr.mxu0 0.0
    %2868 = vmatpush1.msra.mxu0 0.0
    %2869 = vmatprep.subr.mxu0 0.0
    %2870 = vmatpush1.msra.mxu0 0.0
    %2871 = vmatprep.subr.mxu0 0.0
    %2872 = vmatpush1.msra.mxu0 0.0
    %2873 = vmatprep.subr.mxu0 0.0
    %2874 = vmatpush1.msra.mxu0 0.0
    %2875 = vmatprep.subr.mxu0 0.0
    %2876 = vmatpush1.msra.mxu0 0.0
    %2877 = vmatprep.mubr.f32.mxu0 0.0
    %2878 = vmatmul.mubr.f32.gmra.mrb[0].mxu0 %v2740
    %v2879 = vpop.f32.mrb[0].mxu0
    %v2880 = vadd.f32 0.0, %v2879
    %v2881 = vpop.f32.mrb[0].mxu0
    %2882 = vdwg.mxu0
    %v2883 = vadd.f32 %v2724, %v2809
    %v2884 = vadd.f32 %v2725, %v2811
    %v2885 = vadd.f32 %v2726, %v2880
    %v2886 = vld [vmem:[%s2] sm:$0xff]
    %2888 = vset.pattern.permute.xlu0 0
    %2889 = vperm.xlu0 %2888, %v2886
    %v2890 = vpop.permute.xlu0 %2889
    %v2892 = vadd.f32 %v2883, %v2890
    %v2893 = vadd.f32 %v2884, %v2890
    %v2894 = vadd.f32 %v2885, %v2890
    %s2895 = scalar_lea.vmem [#allocation2], 24
    %2896 = vst [vmem:[%s2895] sm:$0xff] %v2892
    %2897 = vst [vmem:[%s2895 + $0x8] sm:$0xff] %v2893
    %2898 = vst.msk [vmem:[%s2895 + $0x10] sm:$0xff] %vm1463, %v2894
    // Predicated region
    $region14: #{tpu_custom_call.1} parent=1 // pred_check
      _
    $region15: #{tpu_custom_call.1} parent=1 // pred_check_branch
      %2900 = sbr.rel (0) target = $region17
    $region16: #{tpu_custom_call.1} parent=1 // pred_region
      %s2902 = ssub.s32 768, 768
      %2903 = vsyncadd [#allocation3], %s2902
      %s2904 = sshll.u32 [#allocation2], 4
      %s2905 = int_to_ptr.vmem [resolvable:$true] %s2904
      %2910 = dma.vmem_to_hbm [thread:$0]  %s2905, 768, %s3, [#allocation3], 384, 384, 24
    $region17: #{tpu_custom_call.1} parent=1 // pred_fallthru
      _
    // Predicated region
    $region18: #{tpu_custom_call.1} parent=1 // pred_check
      _
    $region19: #{tpu_custom_call.1} parent=1 // pred_check_branch
      %2912 = sbr.rel (0) target = $region21
    $region20: #{tpu_custom_call.1} parent=1 // pred_region
      %2913 = dma.done [#allocation3], 768
    $region21: #{tpu_custom_call.1} parent=1 // pred_fallthru
      _
    %2914 = vsyncpa [#allocation3], 1

</llo_original>
